<compile_context>
chip_gen: v7x
topology: tpu7x:2x2x1
jax: 0.10.0
libtpu: 0.0.40
codegen_flags: <defaults>
</compile_context>

<pallas_src>
import functools
import math

import jax
import jax.numpy as jnp
from jax.experimental import pallas as pl
from jax.experimental.pallas import tpu as pltpu


# ----------------------------- config ("args") ------------------------------
class Args:
    encoder_hidden_size = 32
    dropout_rate = 0.1
    tau = 0.5
    pi = 0.3
    beta = 1.0
    max_length = 32        # token sequence length
    max_sent_length = 8    # max number of sentences
    num_classes = 4
    vocab_size = 50
    embed_size = 32
    use_gold_rationale = False
    dataparallel = True


P_OUT = 128  # lane-dense packed slab width (inputs and output)


def _out_layout(S, T, C):
    # lane offsets inside the packed (B, 128) output slab
    off_tz = 0              # token_z        width T
    off_sz = off_tz + T     # sent_z         width S
    off_lg = off_sz + S     # decoder logits width C
    off_pl = off_lg + C     # pred loss      width 1
    off_kl = off_pl + 1     # kl per example width 1
    return off_tz, off_sz, off_lg, off_pl, off_kl


# ------------------------------ fused kernel ---------------------------------
def fused_viberaser_kernel(
        # VMEM inputs (packed lane-dense slabs + weight matrices)
        tok_slab_ref,    # (B*T, 128): emb | pT | ind | amask | one_col
        sent_slab_ref,   # (B*S, 128): pS | mask | drop_mult | logistic noise
        gsel_ref,        # (2*B*S, B*T): start-token selector ; end-1 selector
        brow_ref,        # (B, 128): selBT | selB | onehot labels
        wproj_ref,       # (E, H)
        w1_ref,          # (2H, 128)
        wcls_ref,        # (H, C)
        bias_ref,        # (5, 128): b_proj | b1 | w2 | b_cls | b2
        # output
        out_ref,         # (B, 128) packed, lane-dense
        *, B, S, T, C, E, H, tau, pi):
    f32 = jnp.float32
    BT = B * T
    BS = B * S

    # ---- unpack lane-dense slabs (static lane slices) ----
    tok_slab = tok_slab_ref[...]
    emb = tok_slab[:, 0:E]
    pT = tok_slab[:, E:E + T]
    ind = tok_slab[:, E + T:E + T + BS]
    amask = tok_slab[:, E + T + BS:E + T + BS + 1]
    one_col = tok_slab[:, E + T + BS + 1:E + T + BS + 2]

    sent_slab = sent_slab_ref[...]
    pS = sent_slab[:, 0:S]
    mask_col = sent_slab[:, S:S + 1]
    drop_mult = sent_slab[:, S + 1:S + 2]
    noise = sent_slab[:, S + 2:S + 3]

    brow = brow_ref[...]
    selBT = brow[:, 0:BT]
    selB = brow[:, BT:BT + BS]
    onehot = brow[:, BT + BS:BT + BS + C]

    bias = bias_ref[...]
    b_proj = bias[0:1, 0:H]
    b1 = bias[1:2, :]
    w2 = bias[2:3, :]
    b_cls = bias[3:4, 0:C]
    b2 = bias[4:5, 0:1]

    # ---- 1. token projection: tanh(emb @ Wp + bp) masked by attention ----
    tok = jnp.tanh(
        jnp.dot(emb, wproj_ref[...], preferred_element_type=f32) + b_proj) * amask   # (BT,H)

    # ---- 2. gather start / end-1 token reps with ONE selector matmul ----
    gathered = jnp.dot(gsel_ref[...], tok, preferred_element_type=f32)        # (2BS, H)
    sent_cat = jnp.concatenate(
        [gathered[0:BS, :], gathered[BS:2 * BS, :]], axis=-1)                 # (BS, 2H)

    # ---- 3. rep_to_logit MLP (2H->128->1) + dropout on the logit ----
    hid = jnp.maximum(
        jnp.dot(sent_cat, w1_ref[...], preferred_element_type=f32) + b1, 0.0)
    logit = jnp.sum(hid * w2, axis=-1, keepdims=True) + b2                    # (BS, 1)
    logit = logit * drop_mult                                                 # nn.Dropout (train)

    # ---- 4. RelaxedBernoulli rsample + KL( Bern(logit) || Bern(pi) ) ----
    z_col = jax.nn.sigmoid((logit + noise) * (1.0 / tau)) * mask_col
    p = jax.nn.sigmoid(logit)
    eps = 1e-8
    kl_col = (p * (jnp.log(p + eps) - math.log(pi))
              + (1.0 - p) * (jnp.log(1.0 - p + eps) - math.log(1.0 - pi))) * mask_col

    # ---- 5. sentence z -> token z (ragged repeat_interleave as a matmul) ----
    tz = jnp.dot(ind, z_col, preferred_element_type=f32) + one_col            # (BT, 1)
    token_w = tz * amask

    # ---- 6. fused per-example token aggregation (one wide matmul) ----
    rhs_bt = jnp.concatenate([tz * pT, token_w, tok * token_w], axis=-1)      # (BT, T+1+H)
    agg_bt = jnp.dot(selBT, rhs_bt, preferred_element_type=f32)               # (B, T+1+H)
    token_z_mat = agg_bt[:, 0:T]                                              # (B, T)
    wsum = agg_bt[:, T:T + 1]                                                 # (B, 1)
    pooled = agg_bt[:, T + 1:T + 1 + H] / (wsum + 1e-6)                       # (B, H)

    # decoder stand-in: classifier + NLL (per-example loss)
    dec_logits = jnp.dot(pooled, wcls_ref[...], preferred_element_type=f32) + b_cls   # (B,C)
    m = jnp.max(dec_logits, axis=-1, keepdims=True)
    lse = m + jnp.log(jnp.sum(jnp.exp(dec_logits - m), axis=-1, keepdims=True))
    loss_col = -jnp.sum(onehot * (dec_logits - lse), axis=-1, keepdims=True)  # (B, 1)

    # ---- 7. fused per-example sentence aggregation (one wide matmul) ----
    rhs_bs = jnp.concatenate([kl_col, mask_col, z_col * pS], axis=-1)         # (BS, 2+S)
    agg_bs = jnp.dot(selB, rhs_bs, preferred_element_type=f32)                # (B, 2+S)
    kl_b = agg_bs[:, 0:1] / jnp.maximum(agg_bs[:, 1:2], 1.0)                  # (B, 1)
    sent_z_mat = agg_bs[:, 2:2 + S]                                           # (B, S)

    # ---- 8. assemble in registers, ONE full-width lane-dense store ----
    used = T + S + C + 2
    pad = jnp.zeros((B, P_OUT - used), f32)
    out_ref[...] = jnp.concatenate(
        [token_z_mat, sent_z_mat, dec_logits, loss_col, kl_b, pad], axis=-1)


# ------------------------------ kernel wrapper --------------------------------
def build_fused_call(args, B):
    S, T = args.max_sent_length, args.max_length
    H, E, C = args.encoder_hidden_size, args.embed_size, args.num_classes
    BT, BS = B * T, B * S

    kern = functools.partial(
        fused_viberaser_kernel, B=B, S=S, T=T, C=C, E=E, H=H,
        tau=float(args.tau), pi=float(args.pi))

    def full2(shape):
        return pl.BlockSpec(shape, lambda i: (0, 0))

    return pl.pallas_call(
        kern,
        grid=(1,),                                  # tiny workload: single step
        in_specs=[
            full2((BT, P_OUT)),                     # tok slab
            full2((BS, P_OUT)),                     # sentence slab
            full2((2 * BS, BT)),                    # gather selector
            full2((B, P_OUT)),                      # selBT | selB | onehot
            full2((E, H)),                          # w_proj
            full2((2 * H, 128)),                    # w1
            full2((H, C)),                          # w_cls
            full2((5, 128)),                        # biases / w2 / b2
        ],
        out_specs=full2((B, P_OUT)),
        out_shape=jax.ShapeDtypeStruct((B, P_OUT), jnp.float32),
        compiler_params=pltpu.CompilerParams(
            dimension_semantics=("arbitrary",)),
    )


# --------------------------------- JAX glue ----------------------------------
def viberaser_forward(params, batch, args, rng):
    input_ids = batch['input_ids']
    attention_mask = batch['attention_mask']
    labels = batch['labels']
    sent_starts = batch['sent_starts'].astype(jnp.int32)
    sent_ends = batch['sent_ends'].astype(jnp.int32)
    sent_lengths = batch['sent_lengths'].astype(jnp.int32)
    fix_positions = batch['fix_positions'].astype(jnp.int32)

    B, T = input_ids.shape
    S = sent_starts.shape[1]
    C = args.num_classes
    H = args.encoder_hidden_size
    E = args.embed_size
    BT, BS = B * T, B * S
    f32 = jnp.float32

    assert E + T + BS + 2 <= P_OUT and BT + BS + C <= P_OUT and S + 3 <= P_OUT

    # --- wrapper-side layout plumbing (elementwise + one embedding gather) ---
    emb2d = jnp.take(params['embed'], input_ids.reshape(-1), axis=0).astype(f32)  # (BT,E)
    amask_col = attention_mask.reshape(BT, 1).astype(f32)

    lengths = sent_ends - sent_starts                        # (B, S) int
    cum = jnp.cumsum(lengths, axis=1)
    cumprev = cum - lengths
    total = cum[:, -1]                                       # (B,)
    pos = jnp.arange(T, dtype=jnp.int32)[None, :]
    rel = pos - fix_positions[:, None]                       # (B, T)
    rel_bt = rel.reshape(BT, 1)
    total_bt = jnp.repeat(total, T).reshape(BT, 1)

    ex_tok = jnp.repeat(jnp.arange(B, dtype=jnp.int32), T)   # (BT,) example id per token row
    ex_sent = jnp.repeat(jnp.arange(B, dtype=jnp.int32), S)  # (BS,) example id per sentence row

    # ragged repeat_interleave selector + fixed-prefix/last-position override
    # (integer compares only -- no float floor/modulo tricks)
    ind = ((ex_tok[:, None] == ex_sent[None, :])
           & (rel_bt >= cumprev.reshape(1, BS))
           & (rel_bt < cum.reshape(1, BS))).astype(f32)       # (BT, BS)
    one_col = ((rel_bt < 0) | (rel_bt == total_bt)).astype(f32)

    # column-vector -> lane-dense-row scatter helpers and per-example selectors
    tok_in_ex = jnp.tile(jnp.arange(T, dtype=jnp.int32), B)[:, None]
    pT = (tok_in_ex == jnp.arange(T, dtype=jnp.int32)[None, :]).astype(f32)      # (BT, T)
    sent_in_ex = jnp.tile(jnp.arange(S, dtype=jnp.int32), B)[:, None]
    pS = (sent_in_ex == jnp.arange(S, dtype=jnp.int32)[None, :]).astype(f32)     # (BS, S)
    selBT = (jnp.arange(B, dtype=jnp.int32)[:, None] == ex_tok[None, :]).astype(f32)   # (B, BT)
    selB = (jnp.arange(B, dtype=jnp.int32)[:, None] == ex_sent[None, :]).astype(f32)   # (B, BS)

    # start / end-1 token gather selectors (clamped; padded sentences are masked later)
    starts_cl = jnp.clip(sent_starts, 0, T - 1)
    ends_cl = jnp.clip(sent_ends - 1, 0, T - 1)
    base = (jnp.arange(B, dtype=jnp.int32) * T)[:, None]
    start_flat = (base + starts_cl).reshape(BS)
    end_flat = (base + ends_cl).reshape(BS)
    col = jnp.arange(BT, dtype=jnp.int32)[None, :]
    gsel = jnp.concatenate([(start_flat[:, None] == col).astype(f32),
                            (end_flat[:, None] == col).astype(f32)], axis=0)    # (2BS, BT)

    # sentence mask, RelaxedBernoulli logistic noise, dropout multiplier
    sent_mask = (jnp.arange(S, dtype=jnp.int32)[None, :]
                 < sent_lengths[:, None]).astype(f32)                           # (B, S)
    mask_col = sent_mask.reshape(BS, 1)
    kd, kn = jax.random.split(rng)
    u = jax.random.uniform(kn, (BS, 1), f32, 1e-6, 1.0 - 1e-6)
    noise = jnp.log(u) - jnp.log(1.0 - u)
    keep = (jax.random.uniform(kd, (BS, 1), f32) >= args.dropout_rate).astype(f32)
    drop_mult = keep * (1.0 / (1.0 - args.dropout_rate))

    onehot = jax.nn.one_hot(labels, C, dtype=f32)

    # --- pack lane-dense input slabs (few big DMAs instead of many tiny ones) ---
    tok_used = E + T + BS + 2
    tok_slab = jnp.concatenate(
        [emb2d, pT, ind, amask_col, one_col,
         jnp.zeros((BT, P_OUT - tok_used), f32)], axis=-1)                       # (BT, 128)
    sent_used = S + 3
    sent_slab = jnp.concatenate(
        [pS, mask_col, drop_mult, noise,
         jnp.zeros((BS, P_OUT - sent_used), f32)], axis=-1)                      # (BS, 128)
    brow_used = BT + BS + C
    brow = jnp.concatenate(
        [selBT, selB, onehot, jnp.zeros((B, P_OUT - brow_used), f32)], axis=-1)  # (B, 128)

    def padrow(v):
        v = v.reshape(1, -1).astype(f32)
        return jnp.concatenate([v, jnp.zeros((1, 128 - v.shape[1]), f32)], axis=-1)

    bias_slab = jnp.concatenate(
        [padrow(params['b_proj']),   # row0[:H]  b_proj
         padrow(params['b1']),       # row1      b1
         padrow(params['w2']),       # row2      w2 (Linear(128,1).W^T)
         padrow(params['b_cls']),    # row3[:C]  b_cls
         padrow(params['b2'])],      # row4[0]   b2
        axis=0)                                                                  # (5, 128)

    packed = build_fused_call(args, B)(
        tok_slab, sent_slab, gsel, brow,
        params['w_proj'], params['w1'], params['w_cls'], bias_slab)

    o_tz, o_sz, o_lg, o_pl, o_kl = _out_layout(S, T, C)
    token_z = packed[:, o_tz:o_tz + T]
    sent_z = packed[:, o_sz:o_sz + S]
    dec_logits = packed[:, o_lg:o_lg + C]
    pred_loss = jnp.mean(packed[:, o_pl])
    kl_loss = jnp.mean(packed[:, o_kl])
    loss = pred_loss + args.beta * kl_loss
    sent_rationale_loss = jnp.zeros_like(loss)      # use_gold_rationale == False

    return {'loss': loss, 'pred_loss': pred_loss, 'logits': dec_logits,
            'kl_loss': kl_loss, 'token_z': token_z, 'sent_z': sent_z,
            'sent_rationale_loss': sent_rationale_loss}


# ----------------------------- parameter init -------------------------------
def init_params(args, key):
    keys = jax.random.split(key, 6)
    H, E = args.encoder_hidden_size, args.embed_size

    def g(k, shape, scale):
        return jax.random.normal(k, shape, jnp.float32) * scale

    return {
        'embed':  g(keys[0], (args.vocab_size, E), 0.1),
        'w_proj': g(keys[1], (E, H), 1.0 / float(E) ** 0.5),
        'b_proj': jnp.zeros((1, H), jnp.float32),
        # rep_to_logit_layer: Linear(2H,128) -> ReLU -> Linear(128,1)
        'w1':     g(keys[2], (2 * H, 128), 1.0 / float(2 * H) ** 0.5),
        'b1':     jnp.zeros((1, 128), jnp.float32),
        'w2':     g(keys[3], (1, 128), 1.0 / float(128) ** 0.5),  # Linear(128,1).W^T
        'b2':     jnp.zeros((1, 1), jnp.float32),
        # decoder stand-in classifier
        'w_cls':  g(keys[4], (H, args.num_classes), 1.0 / float(H) ** 0.5),
        'b_cls':  jnp.zeros((1, args.num_classes), jnp.float32),
    }


# ----------------------------------- main ------------------------------------
if __name__ == "__main__":
    args = Args()
    key = jax.random.PRNGKey(0)
    pkey, dkey, rkey = jax.random.split(key, 3)
    params = init_params(args, pkey)

    B, L, S = 2, args.max_length, args.max_sent_length

    # deterministic synthetic batch
    sent_tok_lens = jnp.array([[3, 4, 2, 5, 3, 0, 0, 0],
                               [2, 3, 3, 2, 4, 3, 0, 0]], jnp.int32)
    sent_lengths = jnp.array([5, 6], jnp.int32)          # number of sentences
    fix_positions = jnp.array([1, 1], jnp.int32)         # e.g. [CLS]
    cum = jnp.cumsum(sent_tok_lens, axis=1)
    sent_starts = fix_positions[:, None] + jnp.concatenate(
        [jnp.zeros((B, 1), jnp.int32), cum[:, :-1]], axis=1)
    sent_ends = fix_positions[:, None] + cum
    total = cum[:, -1]
    last_pos = fix_positions + total
    pos = jnp.arange(L)[None, :]
    attention_mask = (pos <= last_pos[:, None]).astype(jnp.int32)
    input_ids = jax.random.randint(dkey, (B, L), 1, args.vocab_size,
                                   dtype=jnp.int32) * attention_mask
    labels = jnp.array([0, 2], jnp.int32)

    batch = dict(input_ids=input_ids, attention_mask=attention_mask,
                 labels=labels, sent_starts=sent_starts, sent_ends=sent_ends,
                 sent_lengths=sent_lengths, fix_positions=fix_positions,
                 max_sent_length=S)

    out = viberaser_forward(params, batch, args, rkey)
    jax.block_until_ready(out['loss'])
    print("KERNEL_OK")
</pallas_src>

<mosaic_0001>
module attributes {stable_mosaic.version = 11 : i64} {
  func.func @fused_viberaser_kernel(%arg0: i32, %arg1: memref<64x128xf32, #tpu.memory_space<vmem>>, %arg2: memref<16x128xf32, #tpu.memory_space<vmem>>, %arg3: memref<32x64xf32, #tpu.memory_space<vmem>>, %arg4: memref<2x128xf32, #tpu.memory_space<vmem>>, %arg5: memref<32x32xf32, #tpu.memory_space<vmem>>, %arg6: memref<64x128xf32, #tpu.memory_space<vmem>>, %arg7: memref<32x4xf32, #tpu.memory_space<vmem>>, %arg8: memref<5x128xf32, #tpu.memory_space<vmem>>, %arg9: memref<2x128xf32, #tpu.memory_space<vmem>>) attributes {dimension_semantics = [#tpu.dimension_semantics<arbitrary>], iteration_bounds = array<i64: 1>, scalar_prefetch = 0 : i64, scratch_operands = 0 : i64, tpu.core_type = #tpu.core_type<tc>, window_params = [{pipeline_mode = #tpu.pipeline_mode<synchronous>, transform_indices = @transform_0, window_bounds = array<i64: 64, 128>}, {pipeline_mode = #tpu.pipeline_mode<synchronous>, transform_indices = @transform_1, window_bounds = array<i64: 16, 128>}, {pipeline_mode = #tpu.pipeline_mode<synchronous>, transform_indices = @transform_2, window_bounds = array<i64: 32, 64>}, {pipeline_mode = #tpu.pipeline_mode<synchronous>, transform_indices = @transform_3, window_bounds = array<i64: 2, 128>}, {pipeline_mode = #tpu.pipeline_mode<synchronous>, transform_indices = @transform_4, window_bounds = array<i64: 32, 32>}, {pipeline_mode = #tpu.pipeline_mode<synchronous>, transform_indices = @transform_5, window_bounds = array<i64: 64, 128>}, {pipeline_mode = #tpu.pipeline_mode<synchronous>, transform_indices = @transform_6, window_bounds = array<i64: 32, 4>}, {pipeline_mode = #tpu.pipeline_mode<synchronous>, transform_indices = @transform_7, window_bounds = array<i64: 5, 128>}, {pipeline_mode = #tpu.pipeline_mode<synchronous>, transform_indices = @transform_8, window_bounds = array<i64: 2, 128>}]} {
    %c0 = arith.constant 0 : index
    %c0_0 = arith.constant 0 : index
    %0 = vector.load %arg1[%c0, %c0_0] : memref<64x128xf32, #tpu.memory_space<vmem>>, vector<64x128xf32>
    %1 = vector.extract_strided_slice %0 {offsets = [0, 0], sizes = [64, 32], strides = [1, 1]} : vector<64x128xf32> to vector<64x32xf32>
    %2 = vector.extract_strided_slice %0 {offsets = [0, 32], sizes = [64, 32], strides = [1, 1]} : vector<64x128xf32> to vector<64x32xf32>
    %3 = vector.extract_strided_slice %0 {offsets = [0, 64], sizes = [64, 16], strides = [1, 1]} : vector<64x128xf32> to vector<64x16xf32>
    %4 = vector.extract_strided_slice %0 {offsets = [0, 80], sizes = [64, 1], strides = [1, 1]} : vector<64x128xf32> to vector<64x1xf32>
    %5 = vector.extract_strided_slice %0 {offsets = [0, 81], sizes = [64, 1], strides = [1, 1]} : vector<64x128xf32> to vector<64x1xf32>
    %c0_1 = arith.constant 0 : index
    %c0_2 = arith.constant 0 : index
    %6 = vector.load %arg2[%c0_1, %c0_2] : memref<16x128xf32, #tpu.memory_space<vmem>>, vector<16x128xf32>
    %7 = vector.extract_strided_slice %6 {offsets = [0, 0], sizes = [16, 8], strides = [1, 1]} : vector<16x128xf32> to vector<16x8xf32>
    %8 = vector.extract_strided_slice %6 {offsets = [0, 8], sizes = [16, 1], strides = [1, 1]} : vector<16x128xf32> to vector<16x1xf32>
    %9 = vector.extract_strided_slice %6 {offsets = [0, 9], sizes = [16, 1], strides = [1, 1]} : vector<16x128xf32> to vector<16x1xf32>
    %10 = vector.extract_strided_slice %6 {offsets = [0, 10], sizes = [16, 1], strides = [1, 1]} : vector<16x128xf32> to vector<16x1xf32>
    %c0_3 = arith.constant 0 : index
    %c0_4 = arith.constant 0 : index
    %11 = vector.load %arg4[%c0_3, %c0_4] : memref<2x128xf32, #tpu.memory_space<vmem>>, vector<2x128xf32>
    %12 = vector.extract_strided_slice %11 {offsets = [0, 0], sizes = [2, 64], strides = [1, 1]} : vector<2x128xf32> to vector<2x64xf32>
    %13 = vector.extract_strided_slice %11 {offsets = [0, 64], sizes = [2, 16], strides = [1, 1]} : vector<2x128xf32> to vector<2x16xf32>
    %14 = vector.extract_strided_slice %11 {offsets = [0, 80], sizes = [2, 4], strides = [1, 1]} : vector<2x128xf32> to vector<2x4xf32>
    %c0_5 = arith.constant 0 : index
    %c0_6 = arith.constant 0 : index
    %15 = vector.load %arg8[%c0_5, %c0_6] : memref<5x128xf32, #tpu.memory_space<vmem>>, vector<5x128xf32>
    %16 = vector.extract_strided_slice %15 {offsets = [0, 0], sizes = [1, 32], strides = [1, 1]} : vector<5x128xf32> to vector<1x32xf32>
    %17 = vector.extract_strided_slice %15 {offsets = [1, 0], sizes = [1, 128], strides = [1, 1]} : vector<5x128xf32> to vector<1x128xf32>
    %18 = vector.extract_strided_slice %15 {offsets = [2, 0], sizes = [1, 128], strides = [1, 1]} : vector<5x128xf32> to vector<1x128xf32>
    %19 = vector.extract_strided_slice %15 {offsets = [3, 0], sizes = [1, 4], strides = [1, 1]} : vector<5x128xf32> to vector<1x4xf32>
    %20 = vector.extract_strided_slice %15 {offsets = [4, 0], sizes = [1, 1], strides = [1, 1]} : vector<5x128xf32> to vector<1x1xf32>
    %c0_7 = arith.constant 0 : index
    %c0_8 = arith.constant 0 : index
    %21 = vector.load %arg5[%c0_7, %c0_8] : memref<32x32xf32, #tpu.memory_space<vmem>>, vector<32x32xf32>
    %cst = arith.constant dense<0.000000e+00> : vector<64x32xf32>
    %22 = tpu.matmul %1, %21, %cst {dimension_numbers = #tpu.dot_dimension_numbers<[1], [0], [0], [1], [0, 0, 1, 1], [], []>} : vector<64x32xf32>, vector<32x32xf32>, vector<64x32xf32> -> vector<64x32xf32>
    %23 = vector.broadcast %16 : vector<1x32xf32> to vector<64x32xf32>
    %24 = arith.addf %22, %23 : vector<64x32xf32>
    %25 = math.tanh %24 : vector<64x32xf32>
    %26 = vector.broadcast %4 : vector<64x1xf32> to vector<64x32xf32>
    %27 = arith.mulf %25, %26 : vector<64x32xf32>
    %c0_9 = arith.constant 0 : index
    %c0_10 = arith.constant 0 : index
    %28 = vector.load %arg3[%c0_9, %c0_10] : memref<32x64xf32, #tpu.memory_space<vmem>>, vector<32x64xf32>
    %cst_11 = arith.constant dense<0.000000e+00> : vector<32x32xf32>
    %29 = tpu.matmul %28, %27, %cst_11 {dimension_numbers = #tpu.dot_dimension_numbers<[1], [0], [0], [1], [0, 0, 1, 1], [], []>} : vector<32x64xf32>, vector<64x32xf32>, vector<32x32xf32> -> vector<32x32xf32>
    %30 = vector.extract_strided_slice %29 {offsets = [0, 0], sizes = [16, 32], strides = [1, 1]} : vector<32x32xf32> to vector<16x32xf32>
    %31 = vector.extract_strided_slice %29 {offsets = [16, 0], sizes = [16, 32], strides = [1, 1]} : vector<32x32xf32> to vector<16x32xf32>
    %32 = tpu.concatenate %30, %31 in 1 : vector<16x32xf32>, vector<16x32xf32> -> vector<16x64xf32>
    %c0_12 = arith.constant 0 : index
    %c0_13 = arith.constant 0 : index
    %33 = vector.load %arg6[%c0_12, %c0_13] : memref<64x128xf32, #tpu.memory_space<vmem>>, vector<64x128xf32>
    %cst_14 = arith.constant dense<0.000000e+00> : vector<16x128xf32>
    %34 = tpu.matmul %32, %33, %cst_14 {dimension_numbers = #tpu.dot_dimension_numbers<[1], [0], [0], [1], [0, 0, 1, 1], [], []>} : vector<16x64xf32>, vector<64x128xf32>, vector<16x128xf32> -> vector<16x128xf32>
    %35 = vector.broadcast %17 : vector<1x128xf32> to vector<16x128xf32>
    %36 = arith.addf %34, %35 : vector<16x128xf32>
    %cst_15 = arith.constant 0.000000e+00 : f32
    %37 = vector.broadcast %cst_15 : f32 to vector<16x128xf32>
    %38 = arith.maximumf %36, %37 : vector<16x128xf32>
    %39 = vector.broadcast %18 : vector<1x128xf32> to vector<16x128xf32>
    %40 = arith.mulf %38, %39 : vector<16x128xf32>
    %cst_16 = arith.constant dense<0.000000e+00> : vector<16xf32>
    %41 = vector.multi_reduction <add>, %40, %cst_16 [1] : vector<16x128xf32> to vector<16xf32>
    %42 = vector.shape_cast %41 : vector<16xf32> to vector<16x1xf32>
    %43 = vector.broadcast %20 : vector<1x1xf32> to vector<16x1xf32>
    %44 = arith.addf %42, %43 : vector<16x1xf32>
    %45 = arith.mulf %44, %9 : vector<16x1xf32>
    %46 = arith.addf %45, %10 : vector<16x1xf32>
    %cst_17 = arith.constant 2.000000e+00 : f32
    %47 = vector.broadcast %cst_17 : f32 to vector<16x1xf32>
    %48 = arith.mulf %46, %47 : vector<16x1xf32>
    %49 = arith.negf %48 : vector<16x1xf32>
    %50 = math.exp %49 : vector<16x1xf32>
    %cst_18 = arith.constant 1.000000e+00 : f32
    %51 = vector.broadcast %cst_18 : f32 to vector<16x1xf32>
    %52 = arith.addf %51, %50 : vector<16x1xf32>
    %53 = arith.divf %51, %52 : vector<16x1xf32>
    %54 = arith.mulf %53, %8 : vector<16x1xf32>
    %55 = arith.negf %45 : vector<16x1xf32>
    %56 = math.exp %55 : vector<16x1xf32>
    %cst_19 = arith.constant 1.000000e+00 : f32
    %57 = vector.broadcast %cst_19 : f32 to vector<16x1xf32>
    %58 = arith.addf %57, %56 : vector<16x1xf32>
    %59 = arith.divf %57, %58 : vector<16x1xf32>
    %cst_20 = arith.constant 9.99999993E-9 : f32
    %60 = vector.broadcast %cst_20 : f32 to vector<16x1xf32>
    %61 = arith.addf %59, %60 : vector<16x1xf32>
    %62 = math.log %61 : vector<16x1xf32>
    %cst_21 = arith.constant -1.20397282 : f32
    %63 = vector.broadcast %cst_21 : f32 to vector<16x1xf32>
    %64 = arith.subf %62, %63 : vector<16x1xf32>
    %65 = arith.mulf %59, %64 : vector<16x1xf32>
    %cst_22 = arith.constant 1.000000e+00 : f32
    %66 = vector.broadcast %cst_22 : f32 to vector<16x1xf32>
    %67 = arith.subf %66, %59 : vector<16x1xf32>
    %cst_23 = arith.constant 1.000000e+00 : f32
    %68 = vector.broadcast %cst_23 : f32 to vector<16x1xf32>
    %69 = arith.subf %68, %59 : vector<16x1xf32>
    %cst_24 = arith.constant 9.99999993E-9 : f32
    %70 = vector.broadcast %cst_24 : f32 to vector<16x1xf32>
    %71 = arith.addf %69, %70 : vector<16x1xf32>
    %72 = math.log %71 : vector<16x1xf32>
    %cst_25 = arith.constant -0.356674939 : f32
    %73 = vector.broadcast %cst_25 : f32 to vector<16x1xf32>
    %74 = arith.subf %72, %73 : vector<16x1xf32>
    %75 = arith.mulf %67, %74 : vector<16x1xf32>
    %76 = arith.addf %65, %75 : vector<16x1xf32>
    %77 = arith.mulf %76, %8 : vector<16x1xf32>
    %cst_26 = arith.constant dense<0.000000e+00> : vector<64x1xf32>
    %78 = tpu.matmul %3, %54, %cst_26 {dimension_numbers = #tpu.dot_dimension_numbers<[1], [0], [0], [1], [0, 0, 1, 1], [], []>} : vector<64x16xf32>, vector<16x1xf32>, vector<64x1xf32> -> vector<64x1xf32>
    %79 = arith.addf %78, %5 : vector<64x1xf32>
    %80 = arith.mulf %79, %4 : vector<64x1xf32>
    %81 = vector.broadcast %79 : vector<64x1xf32> to vector<64x32xf32>
    %82 = arith.mulf %81, %2 : vector<64x32xf32>
    %83 = vector.broadcast %80 : vector<64x1xf32> to vector<64x32xf32>
    %84 = arith.mulf %27, %83 : vector<64x32xf32>
    %85 = tpu.concatenate %82, %80, %84 in 1 : vector<64x32xf32>, vector<64x1xf32>, vector<64x32xf32> -> vector<64x65xf32>
    %cst_27 = arith.constant dense<0.000000e+00> : vector<2x65xf32>
    %86 = tpu.matmul %12, %85, %cst_27 {dimension_numbers = #tpu.dot_dimension_numbers<[1], [0], [0], [1], [0, 0, 1, 1], [], []>} : vector<2x64xf32>, vector<64x65xf32>, vector<2x65xf32> -> vector<2x65xf32>
    %87 = vector.extract_strided_slice %86 {offsets = [0, 0], sizes = [2, 32], strides = [1, 1]} : vector<2x65xf32> to vector<2x32xf32>
    %88 = vector.extract_strided_slice %86 {offsets = [0, 32], sizes = [2, 1], strides = [1, 1]} : vector<2x65xf32> to vector<2x1xf32>
    %89 = vector.extract_strided_slice %86 {offsets = [0, 33], sizes = [2, 32], strides = [1, 1]} : vector<2x65xf32> to vector<2x32xf32>
    %cst_28 = arith.constant 9.99999997E-7 : f32
    %90 = vector.broadcast %cst_28 : f32 to vector<2x1xf32>
    %91 = arith.addf %88, %90 : vector<2x1xf32>
    %92 = vector.broadcast %91 : vector<2x1xf32> to vector<2x32xf32>
    %93 = arith.divf %89, %92 : vector<2x32xf32>
    %c0_29 = arith.constant 0 : index
    %c0_30 = arith.constant 0 : index
    %94 = vector.load %arg7[%c0_29, %c0_30] : memref<32x4xf32, #tpu.memory_space<vmem>>, vector<32x4xf32>
    %cst_31 = arith.constant dense<0.000000e+00> : vector<2x4xf32>
    %95 = tpu.matmul %93, %94, %cst_31 {dimension_numbers = #tpu.dot_dimension_numbers<[1], [0], [0], [1], [0, 0, 1, 1], [], []>} : vector<2x32xf32>, vector<32x4xf32>, vector<2x4xf32> -> vector<2x4xf32>
    %96 = vector.broadcast %19 : vector<1x4xf32> to vector<2x4xf32>
    %97 = arith.addf %95, %96 : vector<2x4xf32>
    %cst_32 = arith.constant dense<0xFF800000> : vector<2xf32>
    %98 = vector.multi_reduction <maximumf>, %97, %cst_32 [1] : vector<2x4xf32> to vector<2xf32>
    %99 = vector.shape_cast %98 : vector<2xf32> to vector<2x1xf32>
    %100 = vector.broadcast %99 : vector<2x1xf32> to vector<2x4xf32>
    %101 = arith.subf %97, %100 : vector<2x4xf32>
    %102 = math.exp %101 : vector<2x4xf32>
    %cst_33 = arith.constant dense<0.000000e+00> : vector<2xf32>
    %103 = vector.multi_reduction <add>, %102, %cst_33 [1] : vector<2x4xf32> to vector<2xf32>
    %104 = vector.shape_cast %103 : vector<2xf32> to vector<2x1xf32>
    %105 = math.log %104 : vector<2x1xf32>
    %106 = arith.addf %99, %105 : vector<2x1xf32>
    %107 = vector.broadcast %106 : vector<2x1xf32> to vector<2x4xf32>
    %108 = arith.subf %97, %107 : vector<2x4xf32>
    %109 = arith.mulf %14, %108 : vector<2x4xf32>
    %cst_34 = arith.constant dense<0.000000e+00> : vector<2xf32>
    %110 = vector.multi_reduction <add>, %109, %cst_34 [1] : vector<2x4xf32> to vector<2xf32>
    %111 = vector.shape_cast %110 : vector<2xf32> to vector<2x1xf32>
    %cst_35 = arith.constant 0.000000e+00 : f32
    %112 = vector.broadcast %cst_35 : f32 to vector<2x1xf32>
    %113 = arith.subf %112, %111 : vector<2x1xf32>
    %114 = vector.broadcast %54 : vector<16x1xf32> to vector<16x8xf32>
    %115 = arith.mulf %114, %7 : vector<16x8xf32>
    %116 = tpu.concatenate %77, %8, %115 in 1 : vector<16x1xf32>, vector<16x1xf32>, vector<16x8xf32> -> vector<16x10xf32>
    %cst_36 = arith.constant dense<0.000000e+00> : vector<2x10xf32>
    %117 = tpu.matmul %13, %116, %cst_36 {dimension_numbers = #tpu.dot_dimension_numbers<[1], [0], [0], [1], [0, 0, 1, 1], [], []>} : vector<2x16xf32>, vector<16x10xf32>, vector<2x10xf32> -> vector<2x10xf32>
    %118 = vector.extract_strided_slice %117 {offsets = [0, 0], sizes = [2, 1], strides = [1, 1]} : vector<2x10xf32> to vector<2x1xf32>
    %119 = vector.extract_strided_slice %117 {offsets = [0, 1], sizes = [2, 1], strides = [1, 1]} : vector<2x10xf32> to vector<2x1xf32>
    %cst_37 = arith.constant 1.000000e+00 : f32
    %120 = vector.broadcast %cst_37 : f32 to vector<2x1xf32>
    %121 = arith.maximumf %119, %120 : vector<2x1xf32>
    %122 = arith.divf %118, %121 : vector<2x1xf32>
    %123 = vector.extract_strided_slice %117 {offsets = [0, 2], sizes = [2, 8], strides = [1, 1]} : vector<2x10xf32> to vector<2x8xf32>
    %cst_38 = arith.constant 0.000000e+00 : f32
    %124 = vector.broadcast %cst_38 : f32 to vector<2x82xf32>
    %125 = tpu.concatenate %87, %123, %97, %113, %122, %124 in 1 : vector<2x32xf32>, vector<2x8xf32>, vector<2x4xf32>, vector<2x1xf32>, vector<2x1xf32>, vector<2x82xf32> -> vector<2x128xf32>
    %c0_39 = arith.constant 0 : index
    %c0_40 = arith.constant 0 : index
    %126 = vector.load %arg9[%c0_39, %c0_40] : memref<2x128xf32, #tpu.memory_space<vmem>>, vector<2x128xf32>
    tpu.vector_store %arg9[%c0_39, %c0_40], %125 {strides = array<i32>} : memref<2x128xf32, #tpu.memory_space<vmem>>, vector<2x128xf32>,
    return
  }
  func.func @transform_0(%arg0: i32) -> (i32, i32) {
    %c0_i32 = arith.constant 0 : i32
    %c0_i32_0 = arith.constant 0 : i32
    %c0_i32_1 = arith.constant 0 : i32
    return %c0_i32, %c0_i32_0 : i32, i32
  }
  func.func @transform_1(%arg0: i32) -> (i32, i32) {
    %c0_i32 = arith.constant 0 : i32
    %c0_i32_0 = arith.constant 0 : i32
    %c0_i32_1 = arith.constant 0 : i32
    return %c0_i32, %c0_i32_0 : i32, i32
  }
  func.func @transform_2(%arg0: i32) -> (i32, i32) {
    %c0_i32 = arith.constant 0 : i32
    %c0_i32_0 = arith.constant 0 : i32
    %c0_i32_1 = arith.constant 0 : i32
    return %c0_i32, %c0_i32_0 : i32, i32
  }
  func.func @transform_3(%arg0: i32) -> (i32, i32) {
    %c0_i32 = arith.constant 0 : i32
    %c0_i32_0 = arith.constant 0 : i32
    %c0_i32_1 = arith.constant 0 : i32
    return %c0_i32, %c0_i32_0 : i32, i32
  }
  func.func @transform_4(%arg0: i32) -> (i32, i32) {
    %c0_i32 = arith.constant 0 : i32
    %c0_i32_0 = arith.constant 0 : i32
    %c0_i32_1 = arith.constant 0 : i32
    return %c0_i32, %c0_i32_0 : i32, i32
  }
  func.func @transform_5(%arg0: i32) -> (i32, i32) {
    %c0_i32 = arith.constant 0 : i32
    %c0_i32_0 = arith.constant 0 : i32
    %c0_i32_1 = arith.constant 0 : i32
    return %c0_i32, %c0_i32_0 : i32, i32
  }
  func.func @transform_6(%arg0: i32) -> (i32, i32) {
    %c0_i32 = arith.constant 0 : i32
    %c0_i32_0 = arith.constant 0 : i32
    %c0_i32_1 = arith.constant 0 : i32
    return %c0_i32, %c0_i32_0 : i32, i32
  }
  func.func @transform_7(%arg0: i32) -> (i32, i32) {
    %c0_i32 = arith.constant 0 : i32
    %c0_i32_0 = arith.constant 0 : i32
    %c0_i32_1 = arith.constant 0 : i32
    return %c0_i32, %c0_i32_0 : i32, i32
  }
  func.func @transform_8(%arg0: i32) -> (i32, i32) {
    %c0_i32 = arith.constant 0 : i32
    %c0_i32_0 = arith.constant 0 : i32
    %c0_i32_1 = arith.constant 0 : i32
    return %c0_i32, %c0_i32_0 : i32, i32
  }
}

</mosaic_0001>

<llo_original>
// kernel: tpu_custom_call.1
$region0: #{tpu_custom_call.1}
  #allocation0 [shape = 'u32[]', space=smem, size = 0x4, offset = 0x4, fixed_abs, tag = 'smem constant byte address 0x4 - core index']
  #allocation1 [shape = 'u32[144,128]{1,0:T(1,128)}', space=vmem, size = 0x12000, scoped, tag = 'internal scratch']
  %s0 = inlined_call_operand.hbm [shape: f32[64,128], index: 0, kind: input, shape index: {}]
  %s1 = inlined_call_operand.hbm [shape: f32[16,128], index: 1, kind: input, shape index: {}]
  %s2 = inlined_call_operand.vmem [shape: f32[32,64], index: 2, kind: input, shape index: {}]
  %s3 = inlined_call_operand.vmem [shape: f32[2,128], index: 3, kind: input, shape index: {}]
  %s4 = inlined_call_operand.hbm [shape: f32[32,32], index: 4, kind: input, shape index: {}]
  %s5 = inlined_call_operand.hbm [shape: f32[64,128], index: 5, kind: input, shape index: {}]
  %s6 = inlined_call_operand.vmem [shape: f32[32,4], index: 6, kind: input, shape index: {}]
  %s7 = inlined_call_operand.vmem [shape: f32[5,128], index: 7, kind: input, shape index: {}]
  %s8 = inlined_call_operand.hbm [shape: f32[2,128], index: 8, kind: output, shape index: {}]
  %s9 = sld [smem:[#allocation0]]
  $region58: #{tpu_custom_call.1} parent=0
    _
  %s11 = ssub.s32 1, %s9
  %s12 = scalar_select 0, %s11, %s9
  $region1: #{tpu_custom_call.1} parent=0
    #allocation2 [shape = 'u8[32768]{0}', space=vmem, size = 0x8000, scoped, tag = 'input window, operand 0, single buffered']
    #allocation3 [shape = 's32[1]{0}', space=sflag, size = 0x4, scoped, tag = 'scoped memory for tpu_custom_call.1']
    #allocation4 [shape = 's32[1]{0}', space=sflag, size = 0x4, scoped, tag = 'scoped memory for tpu_custom_call.1']
    #allocation5 [shape = 'u8[8192]{0}', space=vmem, size = 0x2000, scoped, tag = 'input window, operand 1, single buffered']
    #allocation6 [shape = 's32[1]{0}', space=sflag, size = 0x4, scoped, tag = 'scoped memory for tpu_custom_call.1']
    #allocation7 [shape = 'u8[16384]{0}', space=vmem, size = 0x4000, scoped, tag = 'input window, operand 4, single buffered']
    #allocation8 [shape = 'u8[32768]{0}', space=vmem, size = 0x8000, scoped, tag = 'input window, operand 5, single buffered']
    #allocation9 [shape = 's32[1]{0}', space=sflag, size = 0x4, scoped, tag = 'scoped memory for tpu_custom_call.1']
    #allocation10 [shape = 'u8[1024]{0}', space=vmem, size = 0x400, scoped, tag = 'output window, operand 0, single buffered']
    %13 = vsyncpa [#allocation3], 0
    %14 = vsyncpa [#allocation6], 0
    %15 = vsyncpa [#allocation9], 0
    %16 = vsyncpa [#allocation4], 0
    // Predicated region
    $region2: #{tpu_custom_call.1} parent=1 // pred_check
      _
    $region3: #{tpu_custom_call.1} parent=1 // pred_check_branch
      %18 = sbr.rel (0) target = $region5
    $region4: #{tpu_custom_call.1} parent=1 // pred_region
      %s20 = ssub.s32 1024, 1024
      %21 = vsyncadd [#allocation3], %s20
      %s22 = sshll.u32 [#allocation2], 4
      %s23 = int_to_ptr.vmem [resolvable:$true] %s22
      %28 = dma.hbm_to_vmem [thread:$0]  %s0, 1024, %s23, [#allocation3], 128, 128, 8
    $region5: #{tpu_custom_call.1} parent=1 // pred_fallthru
      _
    // Predicated region
    $region6: #{tpu_custom_call.1} parent=1 // pred_check
      _
    $region7: #{tpu_custom_call.1} parent=1 // pred_check_branch
      %30 = sbr.rel (0) target = $region9
    $region8: #{tpu_custom_call.1} parent=1 // pred_region
      %s32 = ssub.s32 256, 256
      %33 = vsyncadd [#allocation6], %s32
      %s34 = sshll.u32 [#allocation5], 4
      %s35 = int_to_ptr.vmem [resolvable:$true] %s34
      %40 = dma.hbm_to_vmem [thread:$0]  %s1, 256, %s35, [#allocation6], 128, 128, 8
    $region9: #{tpu_custom_call.1} parent=1 // pred_fallthru
      _
    // Predicated region
    $region10: #{tpu_custom_call.1} parent=1 // pred_check
      _
    $region11: #{tpu_custom_call.1} parent=1 // pred_check_branch
      %42 = sbr.rel (0) target = $region13
    $region12: #{tpu_custom_call.1} parent=1 // pred_region
      _
    $region13: #{tpu_custom_call.1} parent=1 // pred_fallthru
      _
    // Predicated region
    $region14: #{tpu_custom_call.1} parent=1 // pred_check
      _
    $region15: #{tpu_custom_call.1} parent=1 // pred_check_branch
      %44 = sbr.rel (0) target = $region17
    $region16: #{tpu_custom_call.1} parent=1 // pred_region
      _
    $region17: #{tpu_custom_call.1} parent=1 // pred_fallthru
      _
    // Predicated region
    $region18: #{tpu_custom_call.1} parent=1 // pred_check
      _
    $region19: #{tpu_custom_call.1} parent=1 // pred_check_branch
      %46 = sbr.rel (0) target = $region21
    $region20: #{tpu_custom_call.1} parent=1 // pred_region
      %s48 = ssub.s32 512, 512
      %49 = vsyncadd [#allocation6], %s48
      %s50 = sshll.u32 [#allocation7], 4
      %s51 = int_to_ptr.vmem [resolvable:$true] %s50
      %56 = dma.hbm_to_vmem [thread:$0]  %s4, 512, %s51, [#allocation6], 128, 128, 8
    $region21: #{tpu_custom_call.1} parent=1 // pred_fallthru
      _
    // Predicated region
    $region22: #{tpu_custom_call.1} parent=1 // pred_check
      _
    $region23: #{tpu_custom_call.1} parent=1 // pred_check_branch
      %58 = sbr.rel (0) target = $region25
    $region24: #{tpu_custom_call.1} parent=1 // pred_region
      %s60 = ssub.s32 1024, 1024
      %61 = vsyncadd [#allocation9], %s60
      %s62 = sshll.u32 [#allocation8], 4
      %s63 = int_to_ptr.vmem [resolvable:$true] %s62
      %68 = dma.hbm_to_vmem [thread:$0]  %s5, 1024, %s63, [#allocation9], 128, 128, 8
    $region25: #{tpu_custom_call.1} parent=1 // pred_fallthru
      _
    // Predicated region
    $region26: #{tpu_custom_call.1} parent=1 // pred_check
      _
    $region27: #{tpu_custom_call.1} parent=1 // pred_check_branch
      %70 = sbr.rel (0) target = $region29
    $region28: #{tpu_custom_call.1} parent=1 // pred_region
      _
    $region29: #{tpu_custom_call.1} parent=1 // pred_fallthru
      _
    // Predicated region
    $region30: #{tpu_custom_call.1} parent=1 // pred_check
      _
    $region31: #{tpu_custom_call.1} parent=1 // pred_check_branch
      %72 = sbr.rel (0) target = $region33
    $region32: #{tpu_custom_call.1} parent=1 // pred_region
      _
    $region33: #{tpu_custom_call.1} parent=1 // pred_fallthru
      _
    // Predicated region
    $region34: #{tpu_custom_call.1} parent=1 // pred_check
      _
    $region35: #{tpu_custom_call.1} parent=1 // pred_check_branch
      %74 = sbr.rel (0) target = $region37
    $region36: #{tpu_custom_call.1} parent=1 // pred_region
      %75 = dma.done [#allocation3], 1024
    $region37: #{tpu_custom_call.1} parent=1 // pred_fallthru
      _
    // Predicated region
    $region38: #{tpu_custom_call.1} parent=1 // pred_check
      _
    $region39: #{tpu_custom_call.1} parent=1 // pred_check_branch
      %77 = sbr.rel (0) target = $region41
    $region40: #{tpu_custom_call.1} parent=1 // pred_region
      %78 = dma.done [#allocation6], 256
    $region41: #{tpu_custom_call.1} parent=1 // pred_fallthru
      _
    // Predicated region
    $region42: #{tpu_custom_call.1} parent=1 // pred_check
      _
    $region43: #{tpu_custom_call.1} parent=1 // pred_check_branch
      %80 = sbr.rel (0) target = $region45
    $region44: #{tpu_custom_call.1} parent=1 // pred_region
      %81 = dma.done [#allocation6], 512
    $region45: #{tpu_custom_call.1} parent=1 // pred_fallthru
      _
    // Predicated region
    $region46: #{tpu_custom_call.1} parent=1 // pred_check
      _
    $region47: #{tpu_custom_call.1} parent=1 // pred_check_branch
      %83 = sbr.rel (0) target = $region49
    $region48: #{tpu_custom_call.1} parent=1 // pred_region
      %84 = dma.done [#allocation9], 1024
    $region49: #{tpu_custom_call.1} parent=1 // pred_fallthru
      _
    %v85 = vld [vmem:[#allocation2] sm:$0xff]
    %v86 = vld [vmem:[#allocation2 + $0x8] sm:$0xff]
    %v87 = vld [vmem:[#allocation2 + $0x10] sm:$0xff]
    %v88 = vld [vmem:[#allocation2 + $0x18] sm:$0xff]
    %v89 = vld [vmem:[#allocation2 + $0x20] sm:$0xff]
    %v90 = vld [vmem:[#allocation2 + $0x28] sm:$0xff]
    %v91 = vld [vmem:[#allocation2 + $0x30] sm:$0xff]
    %v92 = vld [vmem:[#allocation2 + $0x38] sm:$0xff]
    %v93 = vld [vmem:[#allocation5] sm:$0xff]
    %v94 = vld [vmem:[#allocation5 + $0x8] sm:$0xff]
    %v95 = vld [vmem:[%s3] sm:$0x3]
    %v96 = vld [vmem:[%s7] sm:$0x1f]
    %v97 = vld [vmem:[#allocation7] sm:$0xff]
    %v98 = vld [vmem:[#allocation7 + $0x8] sm:$0xff]
    %v99 = vld [vmem:[#allocation7 + $0x10] sm:$0xff]
    %v100 = vld [vmem:[#allocation7 + $0x18] sm:$0xff]
    %v101 = vlaneseq
    %v102 = vshrl.u32 %v101, 7
    %v103 = vsub.s32 0, %v102
    %v104 = vrot.slane %v96, %v103
    %vm105 = vcmask 261120
    %v107 = vsel %vm105, %v85, 0
    %v110 = vsel %vm105, %v86, 0
    %v113 = vsel %vm105, %v87, 0
    %v116 = vsel %vm105, %v88, 0
    %v119 = vsel %vm105, %v89, 0
    %v122 = vsel %vm105, %v90, 0
    %v125 = vsel %vm105, %v91, 0
    %v128 = vsel %vm105, %v92, 0
    %130 = vmatprep.subr.mxu0 0.0
    %131 = vmatpush1.msra.mxu0 %v97
    %132 = vmatprep.subr.mxu0 0.0
    %133 = vmatpush1.msra.mxu0 %v98
    %134 = vmatprep.subr.mxu0 0.0
    %135 = vmatpush1.msra.mxu0 %v99
    %136 = vmatprep.subr.mxu0 0.0
    %137 = vmatpush1.msra.mxu0 %v100
    %138 = vmatprep.subr.mxu0 0.0
    %139 = vmatpush1.msra.mxu0 0.0
    %140 = vmatprep.subr.mxu0 0.0
    %141 = vmatpush1.msra.mxu0 0.0
    %142 = vmatprep.subr.mxu0 0.0
    %143 = vmatpush1.msra.mxu0 0.0
    %144 = vmatprep.subr.mxu0 0.0
    %145 = vmatpush1.msra.mxu0 0.0
    %146 = vmatprep.subr.mxu0 0.0
    %147 = vmatpush1.msra.mxu0 0.0
    %148 = vmatprep.subr.mxu0 0.0
    %149 = vmatpush1.msra.mxu0 0.0
    %150 = vmatprep.subr.mxu0 0.0
    %151 = vmatpush1.msra.mxu0 0.0
    %152 = vmatprep.subr.mxu0 0.0
    %153 = vmatpush1.msra.mxu0 0.0
    %154 = vmatprep.subr.mxu0 0.0
    %155 = vmatpush1.msra.mxu0 0.0
    %156 = vmatprep.subr.mxu0 0.0
    %157 = vmatpush1.msra.mxu0 0.0
    %158 = vmatprep.subr.mxu0 0.0
    %159 = vmatpush1.msra.mxu0 0.0
    %160 = vmatprep.subr.mxu0 0.0
    %161 = vmatpush1.msra.mxu0 0.0
    %162 = vmatprep.subr.mxu0 0.0
    %163 = vmatpush1.msra.mxu0 0.0
    %164 = vmatprep.subr.mxu0 0.0
    %165 = vmatpush1.msra.mxu0 0.0
    %166 = vmatprep.subr.mxu0 0.0
    %167 = vmatpush1.msra.mxu0 0.0
    %168 = vmatprep.subr.mxu0 0.0
    %169 = vmatpush1.msra.mxu0 0.0
    %170 = vmatprep.subr.mxu0 0.0
    %171 = vmatpush1.msra.mxu0 0.0
    %172 = vmatprep.subr.mxu0 0.0
    %173 = vmatpush1.msra.mxu0 0.0
    %174 = vmatprep.subr.mxu0 0.0
    %175 = vmatpush1.msra.mxu0 0.0
    %176 = vmatprep.subr.mxu0 0.0
    %177 = vmatpush1.msra.mxu0 0.0
    %178 = vmatprep.subr.mxu0 0.0
    %179 = vmatpush1.msra.mxu0 0.0
    %180 = vmatprep.subr.mxu0 0.0
    %181 = vmatpush1.msra.mxu0 0.0
    %182 = vmatprep.subr.mxu0 0.0
    %183 = vmatpush1.msra.mxu0 0.0
    %184 = vmatprep.subr.mxu0 0.0
    %185 = vmatpush1.msra.mxu0 0.0
    %186 = vmatprep.subr.mxu0 0.0
    %187 = vmatpush1.msra.mxu0 0.0
    %188 = vmatprep.subr.mxu0 0.0
    %189 = vmatpush1.msra.mxu0 0.0
    %190 = vmatprep.subr.mxu0 0.0
    %191 = vmatpush1.msra.mxu0 0.0
    %192 = vmatprep.subr.mxu0 0.0
    %193 = vmatpush1.msra.mxu0 0.0
    %194 = vmatprep.mubr.f32.mxu0 0.0
    %195 = vmatmul.mubr.f32.gmra.mrb[0].mxu0 %v107
    %v196 = vpop.f32.mrb[0].mxu0
    %v197 = vadd.f32 %v104, %v196
    %v198 = vpop.f32.mrb[0].mxu0
    %199 = vmatprep.mubr.f32.mxu0 0.0
    %200 = vmatmul.mubr.f32.gmra.mrb[0].mxu0 %v110
    %v201 = vpop.f32.mrb[0].mxu0
    %v202 = vadd.f32 %v104, %v201
    %v203 = vpop.f32.mrb[0].mxu0
    %204 = vmatprep.mubr.f32.mxu0 0.0
    %205 = vmatmul.mubr.f32.gmra.mrb[0].mxu0 %v113
    %v206 = vpop.f32.mrb[0].mxu0
    %v207 = vadd.f32 %v104, %v206
    %v208 = vpop.f32.mrb[0].mxu0
    %209 = vmatprep.mubr.f32.mxu0 0.0
    %210 = vmatmul.mubr.f32.gmra.mrb[0].mxu0 %v116
    %v211 = vpop.f32.mrb[0].mxu0
    %v212 = vadd.f32 %v104, %v211
    %v213 = vpop.f32.mrb[0].mxu0
    %214 = vmatprep.mubr.f32.mxu0 0.0
    %215 = vmatmul.mubr.f32.gmra.mrb[0].mxu0 %v119
    %v216 = vpop.f32.mrb[0].mxu0
    %v217 = vadd.f32 %v104, %v216
    %v218 = vpop.f32.mrb[0].mxu0
    %219 = vmatprep.mubr.f32.mxu0 0.0
    %220 = vmatmul.mubr.f32.gmra.mrb[0].mxu0 %v122
    %v221 = vpop.f32.mrb[0].mxu0
    %v222 = vadd.f32 %v104, %v221
    %v223 = vpop.f32.mrb[0].mxu0
    %224 = vmatprep.mubr.f32.mxu0 0.0
    %225 = vmatmul.mubr.f32.gmra.mrb[0].mxu0 %v125
    %v226 = vpop.f32.mrb[0].mxu0
    %v227 = vadd.f32 %v104, %v226
    %v228 = vpop.f32.mrb[0].mxu0
    %229 = vmatprep.mubr.f32.mxu0 0.0
    %230 = vmatmul.mubr.f32.gmra.mrb[0].mxu0 %v128
    %v231 = vpop.f32.mrb[0].mxu0
    %v232 = vadd.f32 %v104, %v231
    %v233 = vpop.f32.mrb[0].mxu0
    %234 = vdwg.mxu0
    %v235 = vtanh.pop %v197
    %v236 = vtanh.pop %v202
    %v237 = vtanh.pop %v207
    %v238 = vtanh.pop %v212
    %v239 = vtanh.pop %v217
    %v240 = vtanh.pop %v222
    %v241 = vtanh.pop %v227
    %v242 = vtanh.pop %v232
    %243 = vset.pattern.permute.xlu0 80
    %244 = vperm.xlu0 %243, %v85
    %v245 = vpop.permute.xlu0 %244
    %247 = vset.pattern.permute.xlu0 80
    %248 = vperm.xlu0 %247, %v86
    %v249 = vpop.permute.xlu0 %248
    %251 = vset.pattern.permute.xlu0 80
    %252 = vperm.xlu0 %251, %v87
    %v253 = vpop.permute.xlu0 %252
    %255 = vset.pattern.permute.xlu0 80
    %256 = vperm.xlu0 %255, %v88
    %v257 = vpop.permute.xlu0 %256
    %259 = vset.pattern.permute.xlu0 80
    %260 = vperm.xlu0 %259, %v89
    %v261 = vpop.permute.xlu0 %260
    %263 = vset.pattern.permute.xlu0 80
    %264 = vperm.xlu0 %263, %v90
    %v265 = vpop.permute.xlu0 %264
    %267 = vset.pattern.permute.xlu0 80
    %268 = vperm.xlu0 %267, %v91
    %v269 = vpop.permute.xlu0 %268
    %271 = vset.pattern.permute.xlu0 80
    %272 = vperm.xlu0 %271, %v92
    %v273 = vpop.permute.xlu0 %272
    %v275 = vmul.f32 %v235, %v245
    %v276 = vmul.f32 %v236, %v249
    %v277 = vmul.f32 %v237, %v253
    %v278 = vmul.f32 %v238, %v257
    %v279 = vmul.f32 %v239, %v261
    %v280 = vmul.f32 %v240, %v265
    %v281 = vmul.f32 %v241, %v269
    %v282 = vmul.f32 %v242, %v273
    %v283 = vld [vmem:[%s2] sm:$0xff]
    %v284 = vld [vmem:[%s2 + $0x8] sm:$0xff]
    %v285 = vld [vmem:[%s2 + $0x10] sm:$0xff]
    %v286 = vld [vmem:[%s2 + $0x18] sm:$0xff]
    %vm287 = vcmask 523264
    %v289 = vsel %vm287, %v283, 0
    %v292 = vsel %vm287, %v284, 0
    %v295 = vsel %vm287, %v285, 0
    %v298 = vsel %vm287, %v286, 0
    %300 = vmatprep.subr.mxu0 0.0
    %301 = vmatpush1.msra.mxu0 %v275
    %302 = vmatprep.subr.mxu0 0.0
    %303 = vmatpush1.msra.mxu0 %v276
    %304 = vmatprep.subr.mxu0 0.0
    %305 = vmatpush1.msra.mxu0 %v277
    %306 = vmatprep.subr.mxu0 0.0
    %307 = vmatpush1.msra.mxu0 %v278
    %308 = vmatprep.subr.mxu0 0.0
    %309 = vmatpush1.msra.mxu0 %v279
    %310 = vmatprep.subr.mxu0 0.0
    %311 = vmatpush1.msra.mxu0 %v280
    %312 = vmatprep.subr.mxu0 0.0
    %313 = vmatpush1.msra.mxu0 %v281
    %314 = vmatprep.subr.mxu0 0.0
    %315 = vmatpush1.msra.mxu0 %v282
    %316 = vmatprep.subr.mxu0 0.0
    %317 = vmatpush1.msra.mxu0 0.0
    %318 = vmatprep.subr.mxu0 0.0
    %319 = vmatpush1.msra.mxu0 0.0
    %320 = vmatprep.subr.mxu0 0.0
    %321 = vmatpush1.msra.mxu0 0.0
    %322 = vmatprep.subr.mxu0 0.0
    %323 = vmatpush1.msra.mxu0 0.0
    %324 = vmatprep.subr.mxu0 0.0
    %325 = vmatpush1.msra.mxu0 0.0
    %326 = vmatprep.subr.mxu0 0.0
    %327 = vmatpush1.msra.mxu0 0.0
    %328 = vmatprep.subr.mxu0 0.0
    %329 = vmatpush1.msra.mxu0 0.0
    %330 = vmatprep.subr.mxu0 0.0
    %331 = vmatpush1.msra.mxu0 0.0
    %332 = vmatprep.subr.mxu0 0.0
    %333 = vmatpush1.msra.mxu0 0.0
    %334 = vmatprep.subr.mxu0 0.0
    %335 = vmatpush1.msra.mxu0 0.0
    %336 = vmatprep.subr.mxu0 0.0
    %337 = vmatpush1.msra.mxu0 0.0
    %338 = vmatprep.subr.mxu0 0.0
    %339 = vmatpush1.msra.mxu0 0.0
    %340 = vmatprep.subr.mxu0 0.0
    %341 = vmatpush1.msra.mxu0 0.0
    %342 = vmatprep.subr.mxu0 0.0
    %343 = vmatpush1.msra.mxu0 0.0
    %344 = vmatprep.subr.mxu0 0.0
    %345 = vmatpush1.msra.mxu0 0.0
    %346 = vmatprep.subr.mxu0 0.0
    %347 = vmatpush1.msra.mxu0 0.0
    %348 = vmatprep.subr.mxu0 0.0
    %349 = vmatpush1.msra.mxu0 0.0
    %350 = vmatprep.subr.mxu0 0.0
    %351 = vmatpush1.msra.mxu0 0.0
    %352 = vmatprep.subr.mxu0 0.0
    %353 = vmatpush1.msra.mxu0 0.0
    %354 = vmatprep.subr.mxu0 0.0
    %355 = vmatpush1.msra.mxu0 0.0
    %356 = vmatprep.subr.mxu0 0.0
    %357 = vmatpush1.msra.mxu0 0.0
    %358 = vmatprep.subr.mxu0 0.0
    %359 = vmatpush1.msra.mxu0 0.0
    %360 = vmatprep.subr.mxu0 0.0
    %361 = vmatpush1.msra.mxu0 0.0
    %362 = vmatprep.subr.mxu0 0.0
    %363 = vmatpush1.msra.mxu0 0.0
    %364 = vmatprep.mubr.f32.mxu0 0.0
    %365 = vmatmul.mubr.f32.gmra.mrb[0].mxu0 %v289
    %v366 = vpop.f32.mrb[0].mxu0
    %v367 = vadd.f32 0.0, %v366
    %v368 = vpop.f32.mrb[0].mxu0
    %369 = vmatprep.mubr.f32.mxu0 0.0
    %370 = vmatmul.mubr.f32.gmra.mrb[0].mxu0 %v292
    %v371 = vpop.f32.mrb[0].mxu0
    %v372 = vadd.f32 0.0, %v371
    %v373 = vpop.f32.mrb[0].mxu0
    %374 = vmatprep.mubr.f32.mxu0 0.0
    %375 = vmatmul.mubr.f32.gmra.mrb[0].mxu0 %v295
    %v376 = vpop.f32.mrb[0].mxu0
    %v377 = vadd.f32 0.0, %v376
    %v378 = vpop.f32.mrb[0].mxu0
    %379 = vmatprep.mubr.f32.mxu0 0.0
    %380 = vmatmul.mubr.f32.gmra.mrb[0].mxu0 %v298
    %v381 = vpop.f32.mrb[0].mxu0
    %v382 = vadd.f32 0.0, %v381
    %v383 = vpop.f32.mrb[0].mxu0
    %384 = vdwg.mxu0
    %387 = vrot.lane.b32.xlu0 %v377, 32
    %v388 = vpop.permute.xlu0 %387
    %389 = vrot.lane.b32.xlu0 %v382, 32
    %v390 = vpop.permute.xlu0 %389
    %v393 = vsel %vm105, %v367, %v388
    %v394 = vsel %vm105, %v372, %v390
    %v395 = vld [vmem:[#allocation8] sm:$0xff]
    %v396 = vld [vmem:[#allocation8 + $0x8] sm:$0xff]
    %v397 = vld [vmem:[#allocation8 + $0x10] sm:$0xff]
    %v398 = vld [vmem:[#allocation8 + $0x18] sm:$0xff]
    %v399 = vld [vmem:[#allocation8 + $0x20] sm:$0xff]
    %v400 = vld [vmem:[#allocation8 + $0x28] sm:$0xff]
    %v401 = vld [vmem:[#allocation8 + $0x30] sm:$0xff]
    %v402 = vld [vmem:[#allocation8 + $0x38] sm:$0xff]
    %v403 = vlaneseq
    %v404 = vshrl.u32 %v403, 7
    %v405 = vsub.s32 1, %v404
    %v406 = vrot.slane %v96, %v405
    %v408 = vsel %vm287, %v393, 0
    %v411 = vsel %vm287, %v394, 0
    %413 = vmatprep.subr.mxu0 0.0
    %414 = vmatpush1.msra.mxu0 %v395
    %415 = vmatprep.subr.mxu0 0.0
    %416 = vmatpush1.msra.mxu0 %v396
    %417 = vmatprep.subr.mxu0 0.0
    %418 = vmatpush1.msra.mxu0 %v397
    %419 = vmatprep.subr.mxu0 0.0
    %420 = vmatpush1.msra.mxu0 %v398
    %421 = vmatprep.subr.mxu0 0.0
    %422 = vmatpush1.msra.mxu0 %v399
    %423 = vmatprep.subr.mxu0 0.0
    %424 = vmatpush1.msra.mxu0 %v400
    %425 = vmatprep.subr.mxu0 0.0
    %426 = vmatpush1.msra.mxu0 %v401
    %427 = vmatprep.subr.mxu0 0.0
    %428 = vmatpush1.msra.mxu0 %v402
    %429 = vmatprep.subr.mxu0 0.0
    %430 = vmatpush1.msra.mxu0 0.0
    %431 = vmatprep.subr.mxu0 0.0
    %432 = vmatpush1.msra.mxu0 0.0
    %433 = vmatprep.subr.mxu0 0.0
    %434 = vmatpush1.msra.mxu0 0.0
    %435 = vmatprep.subr.mxu0 0.0
    %436 = vmatpush1.msra.mxu0 0.0
    %437 = vmatprep.subr.mxu0 0.0
    %438 = vmatpush1.msra.mxu0 0.0
    %439 = vmatprep.subr.mxu0 0.0
    %440 = vmatpush1.msra.mxu0 0.0
    %441 = vmatprep.subr.mxu0 0.0
    %442 = vmatpush1.msra.mxu0 0.0
    %443 = vmatprep.subr.mxu0 0.0
    %444 = vmatpush1.msra.mxu0 0.0
    %445 = vmatprep.subr.mxu0 0.0
    %446 = vmatpush1.msra.mxu0 0.0
    %447 = vmatprep.subr.mxu0 0.0
    %448 = vmatpush1.msra.mxu0 0.0
    %449 = vmatprep.subr.mxu0 0.0
    %450 = vmatpush1.msra.mxu0 0.0
    %451 = vmatprep.subr.mxu0 0.0
    %452 = vmatpush1.msra.mxu0 0.0
    %453 = vmatprep.subr.mxu0 0.0
    %454 = vmatpush1.msra.mxu0 0.0
    %455 = vmatprep.subr.mxu0 0.0
    %456 = vmatpush1.msra.mxu0 0.0
    %457 = vmatprep.subr.mxu0 0.0
    %458 = vmatpush1.msra.mxu0 0.0
    %459 = vmatprep.subr.mxu0 0.0
    %460 = vmatpush1.msra.mxu0 0.0
    %461 = vmatprep.subr.mxu0 0.0
    %462 = vmatpush1.msra.mxu0 0.0
    %463 = vmatprep.subr.mxu0 0.0
    %464 = vmatpush1.msra.mxu0 0.0
    %465 = vmatprep.subr.mxu0 0.0
    %466 = vmatpush1.msra.mxu0 0.0
    %467 = vmatprep.subr.mxu0 0.0
    %468 = vmatpush1.msra.mxu0 0.0
    %469 = vmatprep.subr.mxu0 0.0
    %470 = vmatpush1.msra.mxu0 0.0
    %471 = vmatprep.subr.mxu0 0.0
    %472 = vmatpush1.msra.mxu0 0.0
    %473 = vmatprep.subr.mxu0 0.0
    %474 = vmatpush1.msra.mxu0 0.0
    %475 = vmatprep.subr.mxu0 0.0
    %476 = vmatpush1.msra.mxu0 0.0
    %477 = vmatprep.mubr.f32.mxu0 0.0
    %478 = vmatmul.mubr.f32.gmra.mrb[0].mxu0 %v408
    %v479 = vpop.f32.mrb[0].mxu0
    %v480 = vadd.f32 %v406, %v479
    %v481 = vpop.f32.mrb[0].mxu0
    %482 = vmatprep.mubr.f32.mxu0 0.0
    %483 = vmatmul.mubr.f32.gmra.mrb[0].mxu0 %v411
    %v484 = vpop.f32.mrb[0].mxu0
    %v485 = vadd.f32 %v406, %v484
    %v486 = vpop.f32.mrb[0].mxu0
    %487 = vdwg.mxu0
    %v488 = vmax.f32 %v480, 0.0
    %v489 = vmax.f32 %v485, 0.0
    %v490 = vlaneseq
    %v491 = vshrl.u32 %v490, 7
    %v492 = vsub.s32 2, %v491
    %v493 = vrot.slane %v96, %v492
    %v494 = vmul.f32 %v488, %v493
    %v495 = vmul.f32 %v489, %v493
    %496 = vadd.xlane.f32.xlu0 %v494
    %v497 = vpop.xlane.xlu0 %496
    %498 = vadd.xlane.f32.xlu0 %v495
    %v499 = vpop.xlane.xlu0 %498
    %v500 = vlaneseq
    %v501 = vshrl.u32 %v500, 7
    %v502 = vsub.s32 4, %v501
    %v503 = vrot.slane %v96, %v502
    %v504 = vadd.f32 %v497, %v503
    %v505 = vadd.f32 %v499, %v503
    %508 = vrot.lane.b32.xlu0 %v93, 119
    %v509 = vpop.permute.xlu0 %508
    %510 = vrot.lane.b32.xlu0 %v94, 119
    %v511 = vpop.permute.xlu0 %510
    %v514 = vmul.f32 %v504, %v509
    %v515 = vmul.f32 %v505, %v511
    %516 = vrot.lane.b32.xlu0 %v93, 118
    %v517 = vpop.permute.xlu0 %516
    %518 = vrot.lane.b32.xlu0 %v94, 118
    %v519 = vpop.permute.xlu0 %518
    %v522 = vadd.f32 %v514, %v517
    %v523 = vadd.f32 %v515, %v519
    %v524 = vmul.f32 %v522, 2.0
    %v525 = vmul.f32 %v523, 2.0
    %v526 = vxor.u32 %v524, 2147483648
    %v527 = vxor.u32 %v525, 2147483648
    %v528 = vmul.f32 %v526, 1.442695
    %v529 = vpow.pop %v528
    %v530 = vmul.f32 %v527, 1.442695
    %v531 = vpow.pop %v530
    %v532 = vadd.f32 %v529, 1.0
    %v533 = vadd.f32 %v531, 1.0
    %v534 = vrcp.pop %v532
    %v535 = vmul.f32 1.0, %v534
    %v536 = vrcp.pop %v533
    %v537 = vmul.f32 1.0, %v536
    %538 = vrot.lane.b32.xlu0 %v93, 120
    %v539 = vpop.permute.xlu0 %538
    %540 = vrot.lane.b32.xlu0 %v94, 120
    %v541 = vpop.permute.xlu0 %540
    %v544 = vmul.f32 %v535, %v539
    %v545 = vmul.f32 %v537, %v541
    %v546 = vxor.u32 %v514, 2147483648
    %v547 = vxor.u32 %v515, 2147483648
    %v548 = vmul.f32 %v546, 1.442695
    %v549 = vpow.pop %v548
    %v550 = vmul.f32 %v547, 1.442695
    %v551 = vpow.pop %v550
    %v552 = vadd.f32 %v549, 1.0
    %v553 = vadd.f32 %v551, 1.0
    %v554 = vrcp.pop %v552
    %v555 = vmul.f32 1.0, %v554
    %v556 = vrcp.pop %v553
    %v557 = vmul.f32 1.0, %v556
    %v558 = vadd.f32 %v555, 1e-08
    %v559 = vadd.f32 %v557, 1e-08
    %v560 = vlog2.pop %v558
    %v561 = vmul.f32 %v560, 0.6931472
    %v562 = vlog2.pop %v559
    %v563 = vmul.f32 %v562, 0.6931472
    %v564 = vsub.f32 %v561, -1.2039728
    %v565 = vsub.f32 %v563, -1.2039728
    %v566 = vmul.f32 %v555, %v564
    %v567 = vmul.f32 %v557, %v565
    %v568 = vsub.f32 1.0, %v555
    %v569 = vsub.f32 1.0, %v557
    %v570 = vadd.f32 %v568, 1e-08
    %v571 = vadd.f32 %v569, 1e-08
    %v572 = vlog2.pop %v570
    %v573 = vmul.f32 %v572, 0.6931472
    %v574 = vlog2.pop %v571
    %v575 = vmul.f32 %v574, 0.6931472
    %v576 = vsub.f32 %v573, -0.35667494
    %v577 = vsub.f32 %v575, -0.35667494
    %v578 = vmul.f32 %v568, %v576
    %v579 = vmul.f32 %v569, %v577
    %v580 = vadd.f32 %v566, %v578
    %v581 = vadd.f32 %v567, %v579
    %v582 = vmul.f32 %v580, %v539
    %v583 = vmul.f32 %v581, %v541
    %584 = vrot.lane.b32.xlu0 %v85, 64
    %v585 = vpop.permute.xlu0 %584
    %586 = vrot.lane.b32.xlu0 %v86, 64
    %v587 = vpop.permute.xlu0 %586
    %588 = vrot.lane.b32.xlu0 %v87, 64
    %v589 = vpop.permute.xlu0 %588
    %590 = vrot.lane.b32.xlu0 %v88, 64
    %v591 = vpop.permute.xlu0 %590
    %592 = vrot.lane.b32.xlu0 %v89, 64
    %v593 = vpop.permute.xlu0 %592
    %594 = vrot.lane.b32.xlu0 %v90, 64
    %v595 = vpop.permute.xlu0 %594
    %596 = vrot.lane.b32.xlu0 %v91, 64
    %v597 = vpop.permute.xlu0 %596
    %598 = vrot.lane.b32.xlu0 %v92, 64
    %v599 = vpop.permute.xlu0 %598
    %600 = vrot.lane.b32.xlu0 %v85, 47
    %v601 = vpop.permute.xlu0 %600
    %602 = vrot.lane.b32.xlu0 %v86, 47
    %v603 = vpop.permute.xlu0 %602
    %604 = vrot.lane.b32.xlu0 %v87, 47
    %v605 = vpop.permute.xlu0 %604
    %606 = vrot.lane.b32.xlu0 %v88, 47
    %v607 = vpop.permute.xlu0 %606
    %608 = vrot.lane.b32.xlu0 %v89, 47
    %v609 = vpop.permute.xlu0 %608
    %610 = vrot.lane.b32.xlu0 %v90, 47
    %v611 = vpop.permute.xlu0 %610
    %612 = vrot.lane.b32.xlu0 %v91, 47
    %v613 = vpop.permute.xlu0 %612
    %614 = vrot.lane.b32.xlu0 %v92, 47
    %v615 = vpop.permute.xlu0 %614
    %vm624 = vcmask 130048
    %v625 = vsel %vm624, %v585, 0
    %v627 = vsel %vm624, %v587, 0
    %v629 = vsel %vm624, %v589, 0
    %v631 = vsel %vm624, %v591, 0
    %v633 = vsel %vm624, %v593, 0
    %v635 = vsel %vm624, %v595, 0
    %v637 = vsel %vm624, %v597, 0
    %v639 = vsel %vm624, %v599, 0
    %641 = vmatprep.subr.mxu0 0.0
    %642 = vmatpush1.msra.mxu0 %v544
    %643 = vmatprep.subr.mxu0 0.0
    %644 = vmatpush1.msra.mxu0 %v545
    %645 = vmatprep.subr.mxu0 0.0
    %646 = vmatpush1.msra.mxu0 0.0
    %647 = vmatprep.subr.mxu0 0.0
    %648 = vmatpush1.msra.mxu0 0.0
    %649 = vmatprep.subr.mxu0 0.0
    %650 = vmatpush1.msra.mxu0 0.0
    %651 = vmatprep.subr.mxu0 0.0
    %652 = vmatpush1.msra.mxu0 0.0
    %653 = vmatprep.subr.mxu0 0.0
    %654 = vmatpush1.msra.mxu0 0.0
    %655 = vmatprep.subr.mxu0 0.0
    %656 = vmatpush1.msra.mxu0 0.0
    %657 = vmatprep.subr.mxu0 0.0
    %658 = vmatpush1.msra.mxu0 0.0
    %659 = vmatprep.subr.mxu0 0.0
    %660 = vmatpush1.msra.mxu0 0.0
    %661 = vmatprep.subr.mxu0 0.0
    %662 = vmatpush1.msra.mxu0 0.0
    %663 = vmatprep.subr.mxu0 0.0
    %664 = vmatpush1.msra.mxu0 0.0
    %665 = vmatprep.subr.mxu0 0.0
    %666 = vmatpush1.msra.mxu0 0.0
    %667 = vmatprep.subr.mxu0 0.0
    %668 = vmatpush1.msra.mxu0 0.0
    %669 = vmatprep.subr.mxu0 0.0
    %670 = vmatpush1.msra.mxu0 0.0
    %671 = vmatprep.subr.mxu0 0.0
    %672 = vmatpush1.msra.mxu0 0.0
    %673 = vmatprep.subr.mxu0 0.0
    %674 = vmatpush1.msra.mxu0 0.0
    %675 = vmatprep.subr.mxu0 0.0
    %676 = vmatpush1.msra.mxu0 0.0
    %677 = vmatprep.subr.mxu0 0.0
    %678 = vmatpush1.msra.mxu0 0.0
    %679 = vmatprep.subr.mxu0 0.0
    %680 = vmatpush1.msra.mxu0 0.0
    %681 = vmatprep.subr.mxu0 0.0
    %682 = vmatpush1.msra.mxu0 0.0
    %683 = vmatprep.subr.mxu0 0.0
    %684 = vmatpush1.msra.mxu0 0.0
    %685 = vmatprep.subr.mxu0 0.0
    %686 = vmatpush1.msra.mxu0 0.0
    %687 = vmatprep.subr.mxu0 0.0
    %688 = vmatpush1.msra.mxu0 0.0
    %689 = vmatprep.subr.mxu0 0.0
    %690 = vmatpush1.msra.mxu0 0.0
    %691 = vmatprep.subr.mxu0 0.0
    %692 = vmatpush1.msra.mxu0 0.0
    %693 = vmatprep.subr.mxu0 0.0
    %694 = vmatpush1.msra.mxu0 0.0
    %695 = vmatprep.subr.mxu0 0.0
    %696 = vmatpush1.msra.mxu0 0.0
    %697 = vmatprep.subr.mxu0 0.0
    %698 = vmatpush1.msra.mxu0 0.0
    %699 = vmatprep.subr.mxu0 0.0
    %700 = vmatpush1.msra.mxu0 0.0
    %701 = vmatprep.subr.mxu0 0.0
    %702 = vmatpush1.msra.mxu0 0.0
    %703 = vmatprep.subr.mxu0 0.0
    %704 = vmatpush1.msra.mxu0 0.0
    %705 = vmatprep.mubr.f32.mxu0 0.0
    %706 = vmatmul.mubr.f32.gmra.mrb[0].mxu0 %v625
    %v707 = vpop.f32.mrb[0].mxu0
    %v708 = vadd.f32 %v601, %v707
    %v709 = vpop.f32.mrb[0].mxu0
    %710 = vmatprep.mubr.f32.mxu0 0.0
    %711 = vmatmul.mubr.f32.gmra.mrb[0].mxu0 %v627
    %v712 = vpop.f32.mrb[0].mxu0
    %v713 = vadd.f32 %v603, %v712
    %v714 = vpop.f32.mrb[0].mxu0
    %715 = vmatprep.mubr.f32.mxu0 0.0
    %716 = vmatmul.mubr.f32.gmra.mrb[0].mxu0 %v629
    %v717 = vpop.f32.mrb[0].mxu0
    %v718 = vadd.f32 %v605, %v717
    %v719 = vpop.f32.mrb[0].mxu0
    %720 = vmatprep.mubr.f32.mxu0 0.0
    %721 = vmatmul.mubr.f32.gmra.mrb[0].mxu0 %v631
    %v722 = vpop.f32.mrb[0].mxu0
    %v723 = vadd.f32 %v607, %v722
    %v724 = vpop.f32.mrb[0].mxu0
    %725 = vmatprep.mubr.f32.mxu0 0.0
    %726 = vmatmul.mubr.f32.gmra.mrb[0].mxu0 %v633
    %v727 = vpop.f32.mrb[0].mxu0
    %v728 = vadd.f32 %v609, %v727
    %v729 = vpop.f32.mrb[0].mxu0
    %730 = vmatprep.mubr.f32.mxu0 0.0
    %731 = vmatmul.mubr.f32.gmra.mrb[0].mxu0 %v635
    %v732 = vpop.f32.mrb[0].mxu0
    %v733 = vadd.f32 %v611, %v732
    %v734 = vpop.f32.mrb[0].mxu0
    %735 = vmatprep.mubr.f32.mxu0 0.0
    %736 = vmatmul.mubr.f32.gmra.mrb[0].mxu0 %v637
    %v737 = vpop.f32.mrb[0].mxu0
    %v738 = vadd.f32 %v613, %v737
    %v739 = vpop.f32.mrb[0].mxu0
    %740 = vmatprep.mubr.f32.mxu0 0.0
    %741 = vmatmul.mubr.f32.gmra.mrb[0].mxu0 %v639
    %v742 = vpop.f32.mrb[0].mxu0
    %v743 = vadd.f32 %v615, %v742
    %v744 = vpop.f32.mrb[0].mxu0
    %745 = vdwg.mxu0
    %746 = vrot.lane.b32.xlu0 %v85, 48
    %v747 = vpop.permute.xlu0 %746
    %748 = vrot.lane.b32.xlu0 %v86, 48
    %v749 = vpop.permute.xlu0 %748
    %750 = vrot.lane.b32.xlu0 %v87, 48
    %v751 = vpop.permute.xlu0 %750
    %752 = vrot.lane.b32.xlu0 %v88, 48
    %v753 = vpop.permute.xlu0 %752
    %754 = vrot.lane.b32.xlu0 %v89, 48
    %v755 = vpop.permute.xlu0 %754
    %756 = vrot.lane.b32.xlu0 %v90, 48
    %v757 = vpop.permute.xlu0 %756
    %758 = vrot.lane.b32.xlu0 %v91, 48
    %v759 = vpop.permute.xlu0 %758
    %760 = vrot.lane.b32.xlu0 %v92, 48
    %v761 = vpop.permute.xlu0 %760
    %v770 = vmul.f32 %v708, %v747
    %v771 = vmul.f32 %v713, %v749
    %v772 = vmul.f32 %v718, %v751
    %v773 = vmul.f32 %v723, %v753
    %v774 = vmul.f32 %v728, %v755
    %v775 = vmul.f32 %v733, %v757
    %v776 = vmul.f32 %v738, %v759
    %v777 = vmul.f32 %v743, %v761
    %779 = vset.pattern.permute.xlu0 0
    %780 = vperm.xlu0 %779, %v708
    %v781 = vpop.permute.xlu0 %780
    %784 = vset.pattern.permute.xlu0 0
    %785 = vperm.xlu0 %784, %v713
    %v786 = vpop.permute.xlu0 %785
    %789 = vset.pattern.permute.xlu0 0
    %790 = vperm.xlu0 %789, %v718
    %v791 = vpop.permute.xlu0 %790
    %794 = vset.pattern.permute.xlu0 0
    %795 = vperm.xlu0 %794, %v723
    %v796 = vpop.permute.xlu0 %795
    %799 = vset.pattern.permute.xlu0 0
    %800 = vperm.xlu0 %799, %v728
    %v801 = vpop.permute.xlu0 %800
    %804 = vset.pattern.permute.xlu0 0
    %805 = vperm.xlu0 %804, %v733
    %v806 = vpop.permute.xlu0 %805
    %809 = vset.pattern.permute.xlu0 0
    %810 = vperm.xlu0 %809, %v738
    %v811 = vpop.permute.xlu0 %810
    %814 = vset.pattern.permute.xlu0 0
    %815 = vperm.xlu0 %814, %v743
    %v816 = vpop.permute.xlu0 %815
    %v818 = vmul.f32 %v781, %v85
    %v819 = vmul.f32 %v786, %v86
    %v820 = vmul.f32 %v791, %v87
    %v821 = vmul.f32 %v796, %v88
    %v822 = vmul.f32 %v801, %v89
    %v823 = vmul.f32 %v806, %v90
    %v824 = vmul.f32 %v811, %v91
    %v825 = vmul.f32 %v816, %v92
    %827 = vset.pattern.permute.xlu0 0
    %828 = vperm.xlu0 %827, %v770
    %v829 = vpop.permute.xlu0 %828
    %832 = vset.pattern.permute.xlu0 0
    %833 = vperm.xlu0 %832, %v771
    %v834 = vpop.permute.xlu0 %833
    %837 = vset.pattern.permute.xlu0 0
    %838 = vperm.xlu0 %837, %v772
    %v839 = vpop.permute.xlu0 %838
    %842 = vset.pattern.permute.xlu0 0
    %843 = vperm.xlu0 %842, %v773
    %v844 = vpop.permute.xlu0 %843
    %847 = vset.pattern.permute.xlu0 0
    %848 = vperm.xlu0 %847, %v774
    %v849 = vpop.permute.xlu0 %848
    %852 = vset.pattern.permute.xlu0 0
    %853 = vperm.xlu0 %852, %v775
    %v854 = vpop.permute.xlu0 %853
    %857 = vset.pattern.permute.xlu0 0
    %858 = vperm.xlu0 %857, %v776
    %v859 = vpop.permute.xlu0 %858
    %862 = vset.pattern.permute.xlu0 0
    %863 = vperm.xlu0 %862, %v777
    %v864 = vpop.permute.xlu0 %863
    %v866 = vmul.f32 %v275, %v829
    %v867 = vmul.f32 %v276, %v834
    %v868 = vmul.f32 %v277, %v839
    %v869 = vmul.f32 %v278, %v844
    %v870 = vmul.f32 %v279, %v849
    %v871 = vmul.f32 %v280, %v854
    %v872 = vmul.f32 %v281, %v859
    %v873 = vmul.f32 %v282, %v864
    %882 = vrot.lane.b32.xlu0 %v818, 96
    %v883 = vpop.permute.xlu0 %882
    %884 = vrot.lane.b32.xlu0 %v819, 96
    %v885 = vpop.permute.xlu0 %884
    %886 = vrot.lane.b32.xlu0 %v820, 96
    %v887 = vpop.permute.xlu0 %886
    %888 = vrot.lane.b32.xlu0 %v821, 96
    %v889 = vpop.permute.xlu0 %888
    %890 = vrot.lane.b32.xlu0 %v822, 96
    %v891 = vpop.permute.xlu0 %890
    %892 = vrot.lane.b32.xlu0 %v823, 96
    %v893 = vpop.permute.xlu0 %892
    %894 = vrot.lane.b32.xlu0 %v824, 96
    %v895 = vpop.permute.xlu0 %894
    %896 = vrot.lane.b32.xlu0 %v825, 96
    %v897 = vpop.permute.xlu0 %896
    %906 = vrot.lane.b32.xlu0 %v770, 32
    %v907 = vpop.permute.xlu0 %906
    %908 = vrot.lane.b32.xlu0 %v771, 32
    %v909 = vpop.permute.xlu0 %908
    %910 = vrot.lane.b32.xlu0 %v772, 32
    %v911 = vpop.permute.xlu0 %910
    %912 = vrot.lane.b32.xlu0 %v773, 32
    %v913 = vpop.permute.xlu0 %912
    %914 = vrot.lane.b32.xlu0 %v774, 32
    %v915 = vpop.permute.xlu0 %914
    %916 = vrot.lane.b32.xlu0 %v775, 32
    %v917 = vpop.permute.xlu0 %916
    %918 = vrot.lane.b32.xlu0 %v776, 32
    %v919 = vpop.permute.xlu0 %918
    %920 = vrot.lane.b32.xlu0 %v777, 32
    %v921 = vpop.permute.xlu0 %920
    %938 = vrot.lane.b32.xlu0 %v866, 33
    %v939 = vpop.permute.xlu0 %938
    %940 = vrot.lane.b32.xlu0 %v867, 33
    %v941 = vpop.permute.xlu0 %940
    %942 = vrot.lane.b32.xlu0 %v868, 33
    %v943 = vpop.permute.xlu0 %942
    %944 = vrot.lane.b32.xlu0 %v869, 33
    %v945 = vpop.permute.xlu0 %944
    %946 = vrot.lane.b32.xlu0 %v870, 33
    %v947 = vpop.permute.xlu0 %946
    %948 = vrot.lane.b32.xlu0 %v871, 33
    %v949 = vpop.permute.xlu0 %948
    %950 = vrot.lane.b32.xlu0 %v872, 33
    %v951 = vpop.permute.xlu0 %950
    %952 = vrot.lane.b32.xlu0 %v873, 33
    %v953 = vpop.permute.xlu0 %952
    %v962 = vsel %vm105, %v883, %v907
    %v963 = vsel %vm105, %v885, %v909
    %v964 = vsel %vm105, %v887, %v911
    %v965 = vsel %vm105, %v889, %v913
    %v966 = vsel %vm105, %v891, %v915
    %v967 = vsel %vm105, %v893, %v917
    %v968 = vsel %vm105, %v895, %v919
    %v969 = vsel %vm105, %v897, %v921
    %vm970 = vcmask 269312
    %v971 = vsel %vm970, %v962, %v939
    %v972 = vsel %vm970, %v963, %v941
    %v973 = vsel %vm970, %v964, %v943
    %v974 = vsel %vm970, %v965, %v945
    %v975 = vsel %vm970, %v966, %v947
    %v976 = vsel %vm970, %v967, %v949
    %v977 = vsel %vm970, %v968, %v951
    %v978 = vsel %vm970, %v969, %v953
    %v980 = vsel %vm287, %v95, 0
    %982 = vmatprep.subr.mxu0 0.0
    %983 = vmatpush1.msra.mxu0 %v971
    %984 = vmatprep.subr.mxu0 0.0
    %985 = vmatpush1.msra.mxu0 %v972
    %986 = vmatprep.subr.mxu0 0.0
    %987 = vmatpush1.msra.mxu0 %v973
    %988 = vmatprep.subr.mxu0 0.0
    %989 = vmatpush1.msra.mxu0 %v974
    %990 = vmatprep.subr.mxu0 0.0
    %991 = vmatpush1.msra.mxu0 %v975
    %992 = vmatprep.subr.mxu0 0.0
    %993 = vmatpush1.msra.mxu0 %v976
    %994 = vmatprep.subr.mxu0 0.0
    %995 = vmatpush1.msra.mxu0 %v977
    %996 = vmatprep.subr.mxu0 0.0
    %997 = vmatpush1.msra.mxu0 %v978
    %998 = vmatprep.subr.mxu0 0.0
    %999 = vmatpush1.msra.mxu0 0.0
    %1000 = vmatprep.subr.mxu0 0.0
    %1001 = vmatpush1.msra.mxu0 0.0
    %1002 = vmatprep.subr.mxu0 0.0
    %1003 = vmatpush1.msra.mxu0 0.0
    %1004 = vmatprep.subr.mxu0 0.0
    %1005 = vmatpush1.msra.mxu0 0.0
    %1006 = vmatprep.subr.mxu0 0.0
    %1007 = vmatpush1.msra.mxu0 0.0
    %1008 = vmatprep.subr.mxu0 0.0
    %1009 = vmatpush1.msra.mxu0 0.0
    %1010 = vmatprep.subr.mxu0 0.0
    %1011 = vmatpush1.msra.mxu0 0.0
    %1012 = vmatprep.subr.mxu0 0.0
    %1013 = vmatpush1.msra.mxu0 0.0
    %1014 = vmatprep.subr.mxu0 0.0
    %1015 = vmatpush1.msra.mxu0 0.0
    %1016 = vmatprep.subr.mxu0 0.0
    %1017 = vmatpush1.msra.mxu0 0.0
    %1018 = vmatprep.subr.mxu0 0.0
    %1019 = vmatpush1.msra.mxu0 0.0
    %1020 = vmatprep.subr.mxu0 0.0
    %1021 = vmatpush1.msra.mxu0 0.0
    %1022 = vmatprep.subr.mxu0 0.0
    %1023 = vmatpush1.msra.mxu0 0.0
    %1024 = vmatprep.subr.mxu0 0.0
    %1025 = vmatpush1.msra.mxu0 0.0
    %1026 = vmatprep.subr.mxu0 0.0
    %1027 = vmatpush1.msra.mxu0 0.0
    %1028 = vmatprep.subr.mxu0 0.0
    %1029 = vmatpush1.msra.mxu0 0.0
    %1030 = vmatprep.subr.mxu0 0.0
    %1031 = vmatpush1.msra.mxu0 0.0
    %1032 = vmatprep.subr.mxu0 0.0
    %1033 = vmatpush1.msra.mxu0 0.0
    %1034 = vmatprep.subr.mxu0 0.0
    %1035 = vmatpush1.msra.mxu0 0.0
    %1036 = vmatprep.subr.mxu0 0.0
    %1037 = vmatpush1.msra.mxu0 0.0
    %1038 = vmatprep.subr.mxu0 0.0
    %1039 = vmatpush1.msra.mxu0 0.0
    %1040 = vmatprep.subr.mxu0 0.0
    %1041 = vmatpush1.msra.mxu0 0.0
    %1042 = vmatprep.subr.mxu0 0.0
    %1043 = vmatpush1.msra.mxu0 0.0
    %1044 = vmatprep.subr.mxu0 0.0
    %1045 = vmatpush1.msra.mxu0 0.0
    %1046 = vmatprep.mubr.f32.mxu0 0.0
    %1047 = vmatmul.mubr.f32.gmra.mrb[0].mxu0 %v980
    %v1048 = vpop.f32.mrb[0].mxu0
    %v1049 = vadd.f32 0.0, %v1048
    %v1050 = vpop.f32.mrb[0].mxu0
    %1051 = vdwg.mxu0
    %v1052 = vadd.f32 %v1049, 1e-06
    %1054 = vset.pattern.permute.xlu0 32
    %1055 = vperm.xlu0 %1054, %v1052
    %v1056 = vpop.permute.xlu0 %1055
    %v1058 = vrcp.pop %v1056
    %v1059 = vmul.f32 %v1049, %v1058
    %v1060 = vld [vmem:[%s6] sm:$0xff]
    %v1061 = vld [vmem:[%s6 + $0x8] sm:$0xff]
    %v1062 = vld [vmem:[%s6 + $0x10] sm:$0xff]
    %v1063 = vld [vmem:[%s6 + $0x18] sm:$0xff]
    %v1064 = vlaneseq
    %v1065 = vshrl.u32 %v1064, 7
    %v1066 = vsub.s32 3, %v1065
    %v1067 = vrot.slane %v96, %v1066
    %1069 = vrot.lane.b32.xlu0 %v1059, 95
    %v1070 = vpop.permute.xlu0 %1069
    %v1071 = vsel %vm105, %v1070, 0
    %1073 = vmatprep.subr.mxu0 0.0
    %1074 = vmatpush1.msra.mxu0 %v1060
    %1075 = vmatprep.subr.mxu0 0.0
    %1076 = vmatpush1.msra.mxu0 %v1061
    %1077 = vmatprep.subr.mxu0 0.0
    %1078 = vmatpush1.msra.mxu0 %v1062
    %1079 = vmatprep.subr.mxu0 0.0
    %1080 = vmatpush1.msra.mxu0 %v1063
    %1081 = vmatprep.subr.mxu0 0.0
    %1082 = vmatpush1.msra.mxu0 0.0
    %1083 = vmatprep.subr.mxu0 0.0
    %1084 = vmatpush1.msra.mxu0 0.0
    %1085 = vmatprep.subr.mxu0 0.0
    %1086 = vmatpush1.msra.mxu0 0.0
    %1087 = vmatprep.subr.mxu0 0.0
    %1088 = vmatpush1.msra.mxu0 0.0
    %1089 = vmatprep.subr.mxu0 0.0
    %1090 = vmatpush1.msra.mxu0 0.0
    %1091 = vmatprep.subr.mxu0 0.0
    %1092 = vmatpush1.msra.mxu0 0.0
    %1093 = vmatprep.subr.mxu0 0.0
    %1094 = vmatpush1.msra.mxu0 0.0
    %1095 = vmatprep.subr.mxu0 0.0
    %1096 = vmatpush1.msra.mxu0 0.0
    %1097 = vmatprep.subr.mxu0 0.0
    %1098 = vmatpush1.msra.mxu0 0.0
    %1099 = vmatprep.subr.mxu0 0.0
    %1100 = vmatpush1.msra.mxu0 0.0
    %1101 = vmatprep.subr.mxu0 0.0
    %1102 = vmatpush1.msra.mxu0 0.0
    %1103 = vmatprep.subr.mxu0 0.0
    %1104 = vmatpush1.msra.mxu0 0.0
    %1105 = vmatprep.subr.mxu0 0.0
    %1106 = vmatpush1.msra.mxu0 0.0
    %1107 = vmatprep.subr.mxu0 0.0
    %1108 = vmatpush1.msra.mxu0 0.0
    %1109 = vmatprep.subr.mxu0 0.0
    %1110 = vmatpush1.msra.mxu0 0.0
    %1111 = vmatprep.subr.mxu0 0.0
    %1112 = vmatpush1.msra.mxu0 0.0
    %1113 = vmatprep.subr.mxu0 0.0
    %1114 = vmatpush1.msra.mxu0 0.0
    %1115 = vmatprep.subr.mxu0 0.0
    %1116 = vmatpush1.msra.mxu0 0.0
    %1117 = vmatprep.subr.mxu0 0.0
    %1118 = vmatpush1.msra.mxu0 0.0
    %1119 = vmatprep.subr.mxu0 0.0
    %1120 = vmatpush1.msra.mxu0 0.0
    %1121 = vmatprep.subr.mxu0 0.0
    %1122 = vmatpush1.msra.mxu0 0.0
    %1123 = vmatprep.subr.mxu0 0.0
    %1124 = vmatpush1.msra.mxu0 0.0
    %1125 = vmatprep.subr.mxu0 0.0
    %1126 = vmatpush1.msra.mxu0 0.0
    %1127 = vmatprep.subr.mxu0 0.0
    %1128 = vmatpush1.msra.mxu0 0.0
    %1129 = vmatprep.subr.mxu0 0.0
    %1130 = vmatpush1.msra.mxu0 0.0
    %1131 = vmatprep.subr.mxu0 0.0
    %1132 = vmatpush1.msra.mxu0 0.0
    %1133 = vmatprep.subr.mxu0 0.0
    %1134 = vmatpush1.msra.mxu0 0.0
    %1135 = vmatprep.subr.mxu0 0.0
    %1136 = vmatpush1.msra.mxu0 0.0
    %1137 = vmatprep.mubr.f32.mxu0 0.0
    %1138 = vmatmul.mubr.f32.gmra.mrb[0].mxu0 %v1071
    %v1139 = vpop.f32.mrb[0].mxu0
    %v1140 = vadd.f32 %v1067, %v1139
    %v1141 = vpop.f32.mrb[0].mxu0
    %1142 = vdwg.mxu0
    %vm1143 = vcmask 25600
    %v1144 = vsel %vm1143, %v1140, -inf
    %1145 = vmax.xlane.f32.xlu0 %v1144
    %v1146 = vpop.xlane.xlu0 %1145
    %v1147 = vsub.f32 %v1140, %v1146
    %v1148 = vmul.f32 %v1147, 1.442695
    %v1149 = vpow.pop %v1148
    %v1150 = vsel %vm1143, %v1149, 0.0
    %1151 = vadd.xlane.f32.xlu0 %v1150
    %v1152 = vpop.xlane.xlu0 %1151
    %v1153 = vlog2.pop %v1152
    %v1154 = vmul.f32 %v1153, 0.6931472
    %v1155 = vadd.f32 %v1146, %v1154
    %v1156 = vsub.f32 %v1140, %v1155
    %1158 = vrot.lane.b32.xlu0 %v1156, 80
    %v1159 = vpop.permute.xlu0 %1158
    %v1161 = vmul.f32 %v95, %v1159
    %1163 = vrot.lane.b32.xlu0 %v1161, 48
    %v1164 = vpop.permute.xlu0 %1163
    %v1166 = vsel %vm1143, %v1164, 0.0
    %1167 = vadd.xlane.f32.xlu0 %v1166
    %v1168 = vpop.xlane.xlu0 %1167
    %v1169 = vsub.f32 0.0, %v1168
    %1171 = vset.pattern.permute.xlu0 0
    %1172 = vperm.xlu0 %1171, %v544
    %v1173 = vpop.permute.xlu0 %1172
    %1176 = vset.pattern.permute.xlu0 0
    %1177 = vperm.xlu0 %1176, %v545
    %v1178 = vpop.permute.xlu0 %1177
    %v1180 = vmul.f32 %v1173, %v93
    %v1181 = vmul.f32 %v1178, %v94
    %1182 = vrot.lane.b32.xlu0 %v93, 121
    %v1183 = vpop.permute.xlu0 %1182
    %1184 = vrot.lane.b32.xlu0 %v94, 121
    %v1185 = vpop.permute.xlu0 %1184
    %1190 = vrot.lane.b32.xlu0 %v1180, 2
    %v1191 = vpop.permute.xlu0 %1190
    %1192 = vrot.lane.b32.xlu0 %v1181, 2
    %v1193 = vpop.permute.xlu0 %1192
    %vm1196 = vcmask 7168
    %v1197 = vsel %vm1196, %v582, %v1183
    %v1198 = vsel %vm1196, %v583, %v1185
    %vm1199 = vcmask 15360
    %v1200 = vsel %vm1199, %v1197, %v1191
    %v1201 = vsel %vm1199, %v1198, %v1193
    %1202 = vrot.lane.b32.xlu0 %v95, 64
    %v1203 = vpop.permute.xlu0 %1202
    %v1204 = vsel %vm624, %v1203, 0
    %1206 = vmatprep.subr.mxu0 0.0
    %1207 = vmatpush1.msra.mxu0 %v1200
    %1208 = vmatprep.subr.mxu0 0.0
    %1209 = vmatpush1.msra.mxu0 %v1201
    %1210 = vmatprep.subr.mxu0 0.0
    %1211 = vmatpush1.msra.mxu0 0.0
    %1212 = vmatprep.subr.mxu0 0.0
    %1213 = vmatpush1.msra.mxu0 0.0
    %1214 = vmatprep.subr.mxu0 0.0
    %1215 = vmatpush1.msra.mxu0 0.0
    %1216 = vmatprep.subr.mxu0 0.0
    %1217 = vmatpush1.msra.mxu0 0.0
    %1218 = vmatprep.subr.mxu0 0.0
    %1219 = vmatpush1.msra.mxu0 0.0
    %1220 = vmatprep.subr.mxu0 0.0
    %1221 = vmatpush1.msra.mxu0 0.0
    %1222 = vmatprep.subr.mxu0 0.0
    %1223 = vmatpush1.msra.mxu0 0.0
    %1224 = vmatprep.subr.mxu0 0.0
    %1225 = vmatpush1.msra.mxu0 0.0
    %1226 = vmatprep.subr.mxu0 0.0
    %1227 = vmatpush1.msra.mxu0 0.0
    %1228 = vmatprep.subr.mxu0 0.0
    %1229 = vmatpush1.msra.mxu0 0.0
    %1230 = vmatprep.subr.mxu0 0.0
    %1231 = vmatpush1.msra.mxu0 0.0
    %1232 = vmatprep.subr.mxu0 0.0
    %1233 = vmatpush1.msra.mxu0 0.0
    %1234 = vmatprep.subr.mxu0 0.0
    %1235 = vmatpush1.msra.mxu0 0.0
    %1236 = vmatprep.subr.mxu0 0.0
    %1237 = vmatpush1.msra.mxu0 0.0
    %1238 = vmatprep.subr.mxu0 0.0
    %1239 = vmatpush1.msra.mxu0 0.0
    %1240 = vmatprep.subr.mxu0 0.0
    %1241 = vmatpush1.msra.mxu0 0.0
    %1242 = vmatprep.subr.mxu0 0.0
    %1243 = vmatpush1.msra.mxu0 0.0
    %1244 = vmatprep.subr.mxu0 0.0
    %1245 = vmatpush1.msra.mxu0 0.0
    %1246 = vmatprep.subr.mxu0 0.0
    %1247 = vmatpush1.msra.mxu0 0.0
    %1248 = vmatprep.subr.mxu0 0.0
    %1249 = vmatpush1.msra.mxu0 0.0
    %1250 = vmatprep.subr.mxu0 0.0
    %1251 = vmatpush1.msra.mxu0 0.0
    %1252 = vmatprep.subr.mxu0 0.0
    %1253 = vmatpush1.msra.mxu0 0.0
    %1254 = vmatprep.subr.mxu0 0.0
    %1255 = vmatpush1.msra.mxu0 0.0
    %1256 = vmatprep.subr.mxu0 0.0
    %1257 = vmatpush1.msra.mxu0 0.0
    %1258 = vmatprep.subr.mxu0 0.0
    %1259 = vmatpush1.msra.mxu0 0.0
    %1260 = vmatprep.subr.mxu0 0.0
    %1261 = vmatpush1.msra.mxu0 0.0
    %1262 = vmatprep.subr.mxu0 0.0
    %1263 = vmatpush1.msra.mxu0 0.0
    %1264 = vmatprep.subr.mxu0 0.0
    %1265 = vmatpush1.msra.mxu0 0.0
    %1266 = vmatprep.subr.mxu0 0.0
    %1267 = vmatpush1.msra.mxu0 0.0
    %1268 = vmatprep.subr.mxu0 0.0
    %1269 = vmatpush1.msra.mxu0 0.0
    %1270 = vmatprep.mubr.f32.mxu0 0.0
    %1271 = vmatmul.mubr.f32.gmra.mrb[0].mxu0 %v1204
    %v1272 = vpop.f32.mrb[0].mxu0
    %v1273 = vadd.f32 0.0, %v1272
    %v1274 = vpop.f32.mrb[0].mxu0
    %1275 = vdwg.mxu0
    %v1276 = vmax.f32 %v1273, 1.0
    %1278 = vrot.lane.b32.xlu0 %v1276, 127
    %v1279 = vpop.permute.xlu0 %1278
    %v1281 = vrcp.pop %v1279
    %v1282 = vmul.f32 %v1273, %v1281
    %1284 = vrot.lane.b32.xlu0 %v1273, 30
    %v1285 = vpop.permute.xlu0 %1284
    %1288 = vrot.lane.b32.xlu0 %v1140, 40
    %v1289 = vpop.permute.xlu0 %1288
    %1292 = vrot.lane.b32.xlu0 %v1282, 45
    %v1293 = vpop.permute.xlu0 %1292
    %v1295 = vsel %vm105, %v1049, %v1285
    %vm1296 = vcmask 326656
    %v1297 = vsel %vm1296, %v1295, %v1289
    %vm1298 = vcmask 359424
    %v1299 = vsel %vm1298, %v1297, %v1169
    %vm1300 = vcmask 367616
    %v1301 = vsel %vm1300, %v1299, %v1293
    %vm1302 = vcmask 375808
    %v1303 = vsel %vm1302, %v1301, 0.0
    %1304 = vst [vmem:[#allocation10] sm:$0x3] %v1303
    // Predicated region
    $region50: #{tpu_custom_call.1} parent=1 // pred_check
      _
    $region51: #{tpu_custom_call.1} parent=1 // pred_check_branch
      %1306 = sbr.rel (0) target = $region53
    $region52: #{tpu_custom_call.1} parent=1 // pred_region
      %s1308 = ssub.s32 32, 32
      %1309 = vsyncadd [#allocation4], %s1308
      %s1311 = sshll.u32 [#allocation10], 4
      %s1312 = int_to_ptr.vmem [resolvable:$true] %s1311
      %1314 = dma.vmem_to_hbm [thread:$0]  %s1312, 32, %s8, [#allocation4]
    $region53: #{tpu_custom_call.1} parent=1 // pred_fallthru
      _
    // Predicated region
    $region54: #{tpu_custom_call.1} parent=1 // pred_check
      _
    $region55: #{tpu_custom_call.1} parent=1 // pred_check_branch
      %1316 = sbr.rel (0) target = $region57
    $region56: #{tpu_custom_call.1} parent=1 // pred_region
      %1317 = dma.done [#allocation4], 32
    $region57: #{tpu_custom_call.1} parent=1 // pred_fallthru
      _
    %1318 = vsyncpa [#allocation3], 1
    %1319 = vsyncpa [#allocation6], 1
    %1320 = vsyncpa [#allocation9], 1
    %1321 = vsyncpa [#allocation4], 1

</llo_original>
